<compile_context>
chip_gen: v7x
topology: tpu7x:2x2x1
jax: 0.10.0
libtpu: 0.0.40
codegen_flags: <defaults>
</compile_context>

<pallas_src>
import math

import jax
import jax.numpy as jnp
from jax.experimental import pallas as pl
from jax.experimental.pallas import tpu as pltpu

_SQRT_2_OVER_PI = math.sqrt(2.0 / math.pi)
_LN_EPS = 1e-5                      # nn.LayerNorm default eps
_MM_DTYPE = jnp.bfloat16            # MXU operand dtype (f32 accumulation)
_PREC = jax.lax.Precision.HIGHEST   # reference-only precision


def _gelu(v):
    # BERT tanh-approx GELU (matches the module's custom GELU exactly)
    return 0.5 * v * (1.0 + jnp.tanh(_SQRT_2_OVER_PI * (v + 0.044715 * v * v * v)))


def _layer_norm(v, gamma, beta):
    mu = jnp.mean(v, axis=-1, keepdims=True)
    var = jnp.mean((v - mu) ** 2, axis=-1, keepdims=True)
    return (v - mu) * jax.lax.rsqrt(var + _LN_EPS) * gamma + beta


# --------------------------------------------------------------------------
# Shared per-layer body and epilogue (operate on a (Bt*N, D) f32 slab).
# --------------------------------------------------------------------------
def _mixer_layer(h, ln_pack, tok_bias, bc1, wt1_t, wt2_t, wc1, wc2, Bt, N):
    """One mixer layer.  ln_pack rows: [ln1_g, ln1_b, ln2_g, ln2_b, bc2]."""
    D = h.shape[-1]
    O = wt1_t.shape[-1]
    ln1_g, ln1_b = ln_pack[0:1, :], ln_pack[1:2, :]
    ln2_g, ln2_b = ln_pack[2:3, :], ln_pack[3:4, :]
    bc2 = ln_pack[4:5, :]
    bt1 = tok_bias[0:1, :O]                                   # (1, O) row bias
    bt2 = tok_bias[1:2, :N]                                   # (1, N) row bias

    # ---- PreNormResidual( FeedForward over num_patches, Conv1d k=1 ) ------
    # Work in a (Bt*D, N) layout so both token matmuls cover the whole batch
    # block in one MXU call each; the f32 transposes ride the XLU.
    xn = _layer_norm(h, ln1_g, ln1_b)                         # (Bt*N, D) f32
    xt = jnp.swapaxes(xn.reshape(Bt, N, D), 1, 2)             # (Bt, D, N)
    xt = xt.reshape(Bt * D, N).astype(_MM_DTYPE)              # (Bt*D, N)
    t = jnp.dot(xt, wt1_t, preferred_element_type=jnp.float32) + bt1
    t = _gelu(t)
    r = jnp.dot(t.astype(_MM_DTYPE), wt2_t,
                preferred_element_type=jnp.float32) + bt2     # (Bt*D, N)
    r = jnp.swapaxes(r.reshape(Bt, D, N), 1, 2).reshape(Bt * N, D)
    h = h + r

    # ---- PreNormResidual( FeedForward over dim, Linear ), one big slab ----
    xn = _layer_norm(h, ln2_g, ln2_b).astype(_MM_DTYPE)
    c = jnp.dot(xn, wc1, preferred_element_type=jnp.float32) + bc1
    c = _gelu(c)
    c = jnp.dot(c.astype(_MM_DTYPE), wc2,
                preferred_element_type=jnp.float32) + bc2
    return h + c


def _finalize(h, ln0, w_out, b_out, out_ref, Bt, N):
    """Final LayerNorm, mean-pool over patches, head + sigmoid."""
    D = h.shape[-1]
    hf = _layer_norm(h, ln0[0:1, :], ln0[1:2, :])
    pooled = jnp.mean(hf.reshape(Bt, N, D), axis=1)           # (Bt, D)
    logits = jnp.dot(pooled.astype(_MM_DTYPE), w_out,
                     preferred_element_type=jnp.float32) + b_out
    out_ref[...] = jax.nn.sigmoid(logits)


# --------------------------------------------------------------------------
# Kernel A: all-layer weights resident in VMEM, grid = (B // Bt,)
# --------------------------------------------------------------------------
def _mixer3d_resident_kernel(x_ref, w_emb_ref, b_emb_ref, ln0_ref, w_out_ref,
                             b_out_ref, ln_pack_ref, tok_bias_ref, bc1_ref,
                             wt1_ref, wt2_ref, wc1_ref, wc2_ref, out_ref):
    Bt, N, P = x_ref.shape
    depth = wt1_ref.shape[0]

    xb = x_ref[...].reshape(Bt * N, P)                        # bf16, one big M
    h = jnp.dot(xb, w_emb_ref[...],
                preferred_element_type=jnp.float32) + b_emb_ref[...]

    def layer(l, hh):
        return _mixer_layer(hh, ln_pack_ref[l], tok_bias_ref[l], bc1_ref[l],
                            wt1_ref[l], wt2_ref[l], wc1_ref[l], wc2_ref[l],
                            Bt, N)

    if depth <= 8:                    # static unroll: LLO sees the whole loop
        for l in range(depth):
            h = layer(l, h)
    else:                             # bounded code size / live ranges
        h = jax.lax.fori_loop(0, depth, layer, h)

    _finalize(h, ln0_ref[...], w_out_ref[...], b_out_ref[...], out_ref, Bt, N)


# --------------------------------------------------------------------------
# Kernel B: per-layer weight streaming, grid = (B // Bt, depth)
# --------------------------------------------------------------------------
def _mixer3d_stream_kernel(x_ref, w_emb_ref, b_emb_ref, ln0_ref, w_out_ref,
                           b_out_ref, ln_pack_ref, tok_bias_ref, bc1_ref,
                           wt1_ref, wt2_ref, wc1_ref, wc2_ref, out_ref, h_ref):
    Bt, N, P = x_ref.shape
    l = pl.program_id(1)

    @pl.when(l == 0)                                          # embed once per batch block
    def _():
        xb = x_ref[...].reshape(Bt * N, P)
        h_ref[...] = jnp.dot(xb, w_emb_ref[...],
                             preferred_element_type=jnp.float32) + b_emb_ref[...]

    h = _mixer_layer(h_ref[...], ln_pack_ref[0], tok_bias_ref[0], bc1_ref[0],
                     wt1_ref[0], wt2_ref[0], wc1_ref[0], wc2_ref[0], Bt, N)
    h_ref[...] = h

    @pl.when(l == pl.num_programs(1) - 1)                     # LN0 + pool + head
    def _():
        _finalize(h, ln0_ref[...], w_out_ref[...], b_out_ref[...], out_ref, Bt, N)


# --------------------------------------------------------------------------
# Wrapper: packing, tiling decisions, pallas_call plumbing
# --------------------------------------------------------------------------
def _padded_block_bytes(block_shape, dtype):
    """VMEM footprint of one buffered block, padded to (8, 128) tiles."""
    s = list(block_shape)
    if len(s) < 2:
        s = [1] + s
    s[-1] = -(-s[-1] // 128) * 128
    s[-2] = -(-s[-2] // 8) * 8
    return math.prod(s) * jnp.dtype(dtype).itemsize


def _pick_bt(B, N, per_batch_bytes, act_budget, target_rows=512, max_rows=8192):
    """Smallest divisor of B reaching the row target that fits the activation
    budget; otherwise the largest fitting divisor."""
    fit = [d for d in range(1, B + 1)
           if B % d == 0 and d * per_batch_bytes <= act_budget and d * N <= max_rows]
    if not fit:
        return 1
    for d in fit:
        if d * N >= target_rows:
            return d
    return fit[-1]


def mixer3d_forward(x, params, *, bt=None, force_stream=False):
    B, N = int(x.shape[0]), int(x.shape[1])
    P = int(math.prod(x.shape[2:]))
    xf = x.reshape(B, N, P).astype(_MM_DTYPE)     # x.view(*x.shape[:2], -1), bf16 DMA

    depth = int(params["ln1_g"].shape[0])
    D = int(params["ln1_g"].shape[1])
    C = int(params["w_out"].shape[1])
    D_ef = int(params["wc1"].shape[2])
    O = int(params["wt1"].shape[1])
    W = max(O, N)

    # ---- pack the small per-layer params into a few lane-dense blocks ----
    ln_pack = jnp.stack([params["ln1_g"], params["ln1_b"],
                         params["ln2_g"], params["ln2_b"],
                         params["bc2"]], axis=1).astype(jnp.float32)          # (depth, 5, D)
    tok_bias = jnp.stack(
        [jnp.pad(params["bt1"][..., 0], ((0, 0), (0, W - O))),
         jnp.pad(params["bt2"][..., 0], ((0, 0), (0, W - N)))],
        axis=1).astype(jnp.float32)                                           # (depth, 2, W)
    bc1 = params["bc1"].reshape(depth, 1, D_ef).astype(jnp.float32)
    ln0 = jnp.concatenate([params["ln0_g"], params["ln0_b"]],
                          axis=0).astype(jnp.float32)                         # (2, D)
    b_emb = params["b_emb"].astype(jnp.float32)
    b_out = params["b_out"].astype(jnp.float32)

    # ---- MXU operands in bf16; token weights pre-transposed for (Bt*D, N) ----
    w_emb = params["w_emb"].astype(_MM_DTYPE)                                 # (P, D)
    wt1_t = jnp.swapaxes(params["wt1"], 1, 2).astype(_MM_DTYPE)               # (depth, N, O)
    wt2_t = jnp.swapaxes(params["wt2"], 1, 2).astype(_MM_DTYPE)               # (depth, O, N)
    wc1 = params["wc1"].astype(_MM_DTYPE)                                     # (depth, D, D_ef)
    wc2 = params["wc2"].astype(_MM_DTYPE)                                     # (depth, D_ef, D)
    w_out = params["w_out"].astype(_MM_DTYPE)                                 # (D, C)

    # ---- chip-aware VMEM budget ----
    try:
        vmem_cap = int(pltpu.get_tpu_info().vmem_capacity_bytes)
    except Exception:
        vmem_cap = 64 * 2 ** 20          # conservative (v7x per-core) fallback
    vmem_limit = int(0.85 * vmem_cap)    # leave headroom for Mosaic scratch
    budget = int(0.75 * vmem_limit)

    const_ops = [(w_emb, (P, D)), (b_emb, (1, D)), (ln0, (2, D)),
                 (w_out, (D, C)), (b_out, (1, C))]
    layer_ops = [(ln_pack, (5, D)), (tok_bias, (2, W)), (bc1, (1, D_ef)),
                 (wt1_t, (N, O)), (wt2_t, (O, N)),
                 (wc1, (D, D_ef)), (wc2, (D_ef, D))]
    const_bytes = sum(2 * _padded_block_bytes(s, a.dtype) for a, s in const_ops)
    one_layer = sum(2 * _padded_block_bytes((1,) + s, a.dtype) for a, s in layer_ops)
    all_layers = sum(2 * _padded_block_bytes((depth,) + s, a.dtype) for a, s in layer_ops)

    # rough f32 working set per batch element (h, LN/GELU temps, token slab, x block)
    per_batch_act = (4 * N * (4 * D + 3 * D_ef)
                     + 4 * D * (2 * O + 2 * N)
                     + 2 * 2 * N * max(P, D))

    resident = (not force_stream) and (const_bytes + all_layers + per_batch_act <= budget)
    fixed = const_bytes + (all_layers if resident else one_layer)
    act_budget = max(budget - fixed, per_batch_act)

    if bt is None:
        bt = _pick_bt(B, N, per_batch_act, act_budget)
    assert B % bt == 0 and depth >= 1

    if resident:
        c2, c3 = (lambda i: (0, 0)), (lambda i: (0, 0, 0))
        operands = [
            (xf,       (bt, N, P),       lambda i: (i, 0, 0)),
            (w_emb,    (P, D),           c2),
            (b_emb,    (1, D),           c2),
            (ln0,      (2, D),           c2),
            (w_out,    (D, C),           c2),
            (b_out,    (1, C),           c2),
            (ln_pack,  (depth, 5, D),    c3),
            (tok_bias, (depth, 2, W),    c3),
            (bc1,      (depth, 1, D_ef), c3),
            (wt1_t,    (depth, N, O),    c3),
            (wt2_t,    (depth, O, N),    c3),
            (wc1,      (depth, D, D_ef), c3),
            (wc2,      (depth, D_ef, D), c3),
        ]
        kernel, grid = _mixer3d_resident_kernel, (B // bt,)
        out_spec = pl.BlockSpec((bt, C), lambda i: (i, 0))
        scratch = []
        dims = ("parallel",)
    else:
        c2 = lambda i, l: (0, 0)
        l3 = lambda i, l: (l, 0, 0)
        operands = [
            (xf,       (bt, N, P),   lambda i, l: (i, 0, 0)),
            (w_emb,    (P, D),       c2),
            (b_emb,    (1, D),       c2),
            (ln0,      (2, D),       c2),
            (w_out,    (D, C),       c2),
            (b_out,    (1, C),       c2),
            (ln_pack,  (1, 5, D),    l3),
            (tok_bias, (1, 2, W),    l3),
            (bc1,      (1, 1, D_ef), l3),
            (wt1_t,    (1, N, O),    l3),
            (wt2_t,    (1, O, N),    l3),
            (wc1,      (1, D, D_ef), l3),
            (wc2,      (1, D_ef, D), l3),
        ]
        kernel, grid = _mixer3d_stream_kernel, (B // bt, depth)
        out_spec = pl.BlockSpec((bt, C), lambda i, l: (i, 0))
        scratch = [pltpu.VMEM((bt * N, D), jnp.float32)]
        dims = ("parallel", "arbitrary")

    args = [a for a, _, _ in operands]
    in_specs = [pl.BlockSpec(s, m) for _, s, m in operands]

    out = pl.pallas_call(
        kernel,
        out_shape=jax.ShapeDtypeStruct((B, C), jnp.float32),
        grid_spec=pltpu.PrefetchScalarGridSpec(
            num_scalar_prefetch=0,
            grid=grid,
            in_specs=in_specs,
            out_specs=out_spec,
            scratch_shapes=scratch,
        ),
        compiler_params=pltpu.CompilerParams(
            dimension_semantics=dims,
            vmem_limit_bytes=vmem_limit,
        ),
    )(*args)
    return (out,)


# --------------------------------------------------------------------------
# Parameters and pure-JAX reference (mirrors the PyTorch module, eval mode)
# --------------------------------------------------------------------------
def make_params(key, num_patches, P, dim, depth, num_classes, ef):
    ks = jax.random.split(key, 12)

    def nrm(k, shape, scale=0.05):
        return (scale * jax.random.normal(k, shape)).astype(jnp.float32)

    return dict(
        w_emb=nrm(ks[0], (P, dim)),
        b_emb=nrm(ks[1], (1, dim)),
        ln1_g=jnp.ones((depth, dim), jnp.float32),
        ln1_b=jnp.zeros((depth, dim), jnp.float32),
        wt1=nrm(ks[2], (depth, num_patches * ef, num_patches)),
        bt1=nrm(ks[3], (depth, num_patches * ef, 1)),
        wt2=nrm(ks[4], (depth, num_patches, num_patches * ef)),
        bt2=nrm(ks[5], (depth, num_patches, 1)),
        ln2_g=jnp.ones((depth, dim), jnp.float32),
        ln2_b=jnp.zeros((depth, dim), jnp.float32),
        wc1=nrm(ks[6], (depth, dim, dim * ef)),
        bc1=nrm(ks[7], (depth, dim * ef)),
        wc2=nrm(ks[8], (depth, dim * ef, dim)),
        bc2=nrm(ks[9], (depth, dim)),
        ln0_g=jnp.ones((1, dim), jnp.float32),
        ln0_b=jnp.zeros((1, dim), jnp.float32),
        w_out=nrm(ks[10], (dim, num_classes)),
        b_out=nrm(ks[11], (1, num_classes)),
    )


def reference_forward(x, params):
    B, N = x.shape[:2]
    xf = x.reshape(B, N, -1).astype(jnp.float32)
    h = jnp.einsum("bnp,pd->bnd", xf, params["w_emb"], precision=_PREC) + params["b_emb"][None]
    depth = params["ln1_g"].shape[0]
    for l in range(depth):
        xn = _layer_norm(h, params["ln1_g"][l], params["ln1_b"][l])
        t = jnp.einsum("on,bnd->bod", params["wt1"][l], xn, precision=_PREC) + params["bt1"][l][None]
        t = _gelu(t)
        t = jnp.einsum("no,bod->bnd", params["wt2"][l], t, precision=_PREC) + params["bt2"][l][None]
        h = h + t
        xn = _layer_norm(h, params["ln2_g"][l], params["ln2_b"][l])
        c = jnp.einsum("bnd,de->bne", xn, params["wc1"][l], precision=_PREC) + params["bc1"][l][None, None]
        c = _gelu(c)
        c = jnp.einsum("bne,ed->bnd", c, params["wc2"][l], precision=_PREC) + params["bc2"][l][None, None]
        h = h + c
    h = _layer_norm(h, params["ln0_g"][0], params["ln0_b"][0])
    pooled = jnp.mean(h, axis=1)
    logits = jnp.dot(pooled, params["w_out"], precision=_PREC) + params["b_out"]
    return jax.nn.sigmoid(logits)


if __name__ == "__main__":
    # Small, forward-consistent shapes
    B, num_patches, channels = 2, 8, 4
    patch_size = (2, 2, 2)
    dim, depth, num_classes, ef = 32, 2, 3, 4
    P = channels * math.prod(patch_size)   # int(np.prod(patch_size) * channels) = 32

    key = jax.random.PRNGKey(0)
    kx, kp = jax.random.split(key)
    x = jax.random.normal(kx, (B, num_patches, channels) + patch_size, dtype=jnp.float32)
    params = make_params(kp, num_patches, P, dim, depth, num_classes, ef)

    ref = reference_forward(x, params)

    # Default path (weights-resident for this small model)
    (out,) = mixer3d_forward(x, params)
    out = jax.block_until_ready(out)
    assert out.shape == (B, num_classes)
    assert bool(jnp.all(jnp.isfinite(out)))
    # bf16 MXU operands + f32 accumulation vs. f32-HIGHEST reference
    assert jnp.allclose(out, ref, atol=5e-3, rtol=5e-3), float(jnp.max(jnp.abs(out - ref)))

    # Depth-streaming path (used when the model's weights don't fit in VMEM)
    (out_s,) = mixer3d_forward(x, params, force_stream=True)
    out_s = jax.block_until_ready(out_s)
    assert jnp.allclose(out_s, ref, atol=5e-3, rtol=5e-3), float(jnp.max(jnp.abs(out_s - ref)))

    # TODO(synk): nn.Dropout (p=0.0 / eval) and training utilities (BCELoss, fit,
    # evaluate_data, embed_data) are outside the forward hot path and are not implemented.
    print("KERNEL_OK")
</pallas_src>

<mosaic_0001>
module attributes {stable_mosaic.version = 11 : i64} {
  func.func @_mixer3d_resident_kernel(%arg0: i32, %arg1: memref<2x8x32xbf16, #tpu.memory_space<vmem>>, %arg2: memref<32x32xbf16, #tpu.memory_space<vmem>>, %arg3: memref<1x32xf32, #tpu.memory_space<vmem>>, %arg4: memref<2x32xf32, #tpu.memory_space<vmem>>, %arg5: memref<32x3xbf16, #tpu.memory_space<vmem>>, %arg6: memref<1x3xf32, #tpu.memory_space<vmem>>, %arg7: memref<2x5x32xf32, #tpu.memory_space<vmem>>, %arg8: memref<2x2x32xf32, #tpu.memory_space<vmem>>, %arg9: memref<2x1x128xf32, #tpu.memory_space<vmem>>, %arg10: memref<2x8x32xbf16, #tpu.memory_space<vmem>>, %arg11: memref<2x32x8xbf16, #tpu.memory_space<vmem>>, %arg12: memref<2x32x128xbf16, #tpu.memory_space<vmem>>, %arg13: memref<2x128x32xbf16, #tpu.memory_space<vmem>>, %arg14: memref<2x3xf32, #tpu.memory_space<vmem>>) attributes {dimension_semantics = [#tpu.dimension_semantics<parallel>], iteration_bounds = array<i64: 1>, scalar_prefetch = 0 : i64, scratch_operands = 0 : i64, tpu.core_type = #tpu.core_type<tc>, window_params = [{transform_indices = @transform_0, window_bounds = array<i64: 2, 8, 32>}, {pipeline_mode = #tpu.pipeline_mode<synchronous>, transform_indices = @transform_1, window_bounds = array<i64: 32, 32>}, {pipeline_mode = #tpu.pipeline_mode<synchronous>, transform_indices = @transform_2, window_bounds = array<i64: 1, 32>}, {pipeline_mode = #tpu.pipeline_mode<synchronous>, transform_indices = @transform_3, window_bounds = array<i64: 2, 32>}, {pipeline_mode = #tpu.pipeline_mode<synchronous>, transform_indices = @transform_4, window_bounds = array<i64: 32, 3>}, {pipeline_mode = #tpu.pipeline_mode<synchronous>, transform_indices = @transform_5, window_bounds = array<i64: 1, 3>}, {pipeline_mode = #tpu.pipeline_mode<synchronous>, transform_indices = @transform_6, window_bounds = array<i64: 2, 5, 32>}, {pipeline_mode = #tpu.pipeline_mode<synchronous>, transform_indices = @transform_7, window_bounds = array<i64: 2, 2, 32>}, {pipeline_mode = #tpu.pipeline_mode<synchronous>, transform_indices = @transform_8, window_bounds = array<i64: 2, 1, 128>}, {pipeline_mode = #tpu.pipeline_mode<synchronous>, transform_indices = @transform_9, window_bounds = array<i64: 2, 8, 32>}, {pipeline_mode = #tpu.pipeline_mode<synchronous>, transform_indices = @transform_10, window_bounds = array<i64: 2, 32, 8>}, {pipeline_mode = #tpu.pipeline_mode<synchronous>, transform_indices = @transform_11, window_bounds = array<i64: 2, 32, 128>}, {pipeline_mode = #tpu.pipeline_mode<synchronous>, transform_indices = @transform_12, window_bounds = array<i64: 2, 128, 32>}, {transform_indices = @transform_13, window_bounds = array<i64: 2, 3>}]} {
    %c0 = arith.constant 0 : index
    %c0_0 = arith.constant 0 : index
    %c0_1 = arith.constant 0 : index
    %0 = vector.load %arg1[%c0, %c0_0, %c0_1] : memref<2x8x32xbf16, #tpu.memory_space<vmem>>, vector<2x8x32xbf16>
    %1 = vector.shape_cast %0 : vector<2x8x32xbf16> to vector<16x32xbf16>
    %c0_2 = arith.constant 0 : index
    %c0_3 = arith.constant 0 : index
    %2 = vector.load %arg2[%c0_2, %c0_3] : memref<32x32xbf16, #tpu.memory_space<vmem>>, vector<32x32xbf16>
    %cst = arith.constant dense<0.000000e+00> : vector<16x32xf32>
    %3 = tpu.matmul %1, %2, %cst {dimension_numbers = #tpu.dot_dimension_numbers<[1], [0], [0], [1], [0, 0, 1, 1], [], []>} : vector<16x32xbf16>, vector<32x32xbf16>, vector<16x32xf32> -> vector<16x32xf32>
    %c0_4 = arith.constant 0 : index
    %c0_5 = arith.constant 0 : index
    %4 = vector.load %arg3[%c0_4, %c0_5] : memref<1x32xf32, #tpu.memory_space<vmem>>, vector<1x32xf32>
    %5 = vector.broadcast %4 : vector<1x32xf32> to vector<16x32xf32>
    %6 = arith.addf %3, %5 : vector<16x32xf32>
    %c0_6 = arith.constant 0 : index
    %c0_7 = arith.constant 0 : index
    %c0_8 = arith.constant 0 : index
    %7 = vector.load %arg7[%c0_6, %c0_7, %c0_8] : memref<2x5x32xf32, #tpu.memory_space<vmem>>, vector<1x5x32xf32>
    %8 = vector.shape_cast %7 : vector<1x5x32xf32> to vector<5x32xf32>
    %c0_9 = arith.constant 0 : index
    %c0_10 = arith.constant 0 : index
    %c0_11 = arith.constant 0 : index
    %9 = vector.load %arg8[%c0_9, %c0_10, %c0_11] : memref<2x2x32xf32, #tpu.memory_space<vmem>>, vector<1x2x32xf32>
    %10 = vector.shape_cast %9 : vector<1x2x32xf32> to vector<2x32xf32>
    %c0_12 = arith.constant 0 : index
    %c0_13 = arith.constant 0 : index
    %c0_14 = arith.constant 0 : index
    %11 = vector.load %arg9[%c0_12, %c0_13, %c0_14] : memref<2x1x128xf32, #tpu.memory_space<vmem>>, vector<1x1x128xf32>
    %12 = vector.shape_cast %11 : vector<1x1x128xf32> to vector<1x128xf32>
    %c0_15 = arith.constant 0 : index
    %c0_16 = arith.constant 0 : index
    %c0_17 = arith.constant 0 : index
    %13 = vector.load %arg10[%c0_15, %c0_16, %c0_17] : memref<2x8x32xbf16, #tpu.memory_space<vmem>>, vector<1x8x32xbf16>
    %14 = vector.shape_cast %13 : vector<1x8x32xbf16> to vector<8x32xbf16>
    %c0_18 = arith.constant 0 : index
    %c0_19 = arith.constant 0 : index
    %c0_20 = arith.constant 0 : index
    %15 = vector.load %arg11[%c0_18, %c0_19, %c0_20] : memref<2x32x8xbf16, #tpu.memory_space<vmem>>, vector<1x32x8xbf16>
    %16 = vector.shape_cast %15 : vector<1x32x8xbf16> to vector<32x8xbf16>
    %c0_21 = arith.constant 0 : index
    %c0_22 = arith.constant 0 : index
    %c0_23 = arith.constant 0 : index
    %17 = vector.load %arg12[%c0_21, %c0_22, %c0_23] : memref<2x32x128xbf16, #tpu.memory_space<vmem>>, vector<1x32x128xbf16>
    %18 = vector.shape_cast %17 : vector<1x32x128xbf16> to vector<32x128xbf16>
    %c0_24 = arith.constant 0 : index
    %c0_25 = arith.constant 0 : index
    %c0_26 = arith.constant 0 : index
    %19 = vector.load %arg13[%c0_24, %c0_25, %c0_26] : memref<2x128x32xbf16, #tpu.memory_space<vmem>>, vector<1x128x32xbf16>
    %20 = vector.shape_cast %19 : vector<1x128x32xbf16> to vector<128x32xbf16>
    %21 = vector.extract_strided_slice %8 {offsets = [0, 0], sizes = [1, 32], strides = [1, 1]} : vector<5x32xf32> to vector<1x32xf32>
    %22 = vector.extract_strided_slice %8 {offsets = [1, 0], sizes = [1, 32], strides = [1, 1]} : vector<5x32xf32> to vector<1x32xf32>
    %23 = vector.extract_strided_slice %8 {offsets = [2, 0], sizes = [1, 32], strides = [1, 1]} : vector<5x32xf32> to vector<1x32xf32>
    %24 = vector.extract_strided_slice %8 {offsets = [3, 0], sizes = [1, 32], strides = [1, 1]} : vector<5x32xf32> to vector<1x32xf32>
    %25 = vector.extract_strided_slice %8 {offsets = [4, 0], sizes = [1, 32], strides = [1, 1]} : vector<5x32xf32> to vector<1x32xf32>
    %26 = vector.extract_strided_slice %10 {offsets = [0, 0], sizes = [1, 32], strides = [1, 1]} : vector<2x32xf32> to vector<1x32xf32>
    %27 = vector.extract_strided_slice %10 {offsets = [1, 0], sizes = [1, 8], strides = [1, 1]} : vector<2x32xf32> to vector<1x8xf32>
    %cst_27 = arith.constant dense<0.000000e+00> : vector<16xf32>
    %28 = vector.multi_reduction <add>, %6, %cst_27 [1] : vector<16x32xf32> to vector<16xf32>
    %29 = vector.shape_cast %28 : vector<16xf32> to vector<16x1xf32>
    %cst_28 = arith.constant 3.200000e+01 : f32
    %30 = vector.broadcast %cst_28 : f32 to vector<16x1xf32>
    %31 = arith.divf %29, %30 : vector<16x1xf32>
    %32 = vector.broadcast %31 : vector<16x1xf32> to vector<16x32xf32>
    %33 = arith.subf %6, %32 : vector<16x32xf32>
    %34 = arith.mulf %33, %33 : vector<16x32xf32>
    %cst_29 = arith.constant dense<0.000000e+00> : vector<16xf32>
    %35 = vector.multi_reduction <add>, %34, %cst_29 [1] : vector<16x32xf32> to vector<16xf32>
    %36 = vector.shape_cast %35 : vector<16xf32> to vector<16x1xf32>
    %cst_30 = arith.constant 3.200000e+01 : f32
    %37 = vector.broadcast %cst_30 : f32 to vector<16x1xf32>
    %38 = arith.divf %36, %37 : vector<16x1xf32>
    %39 = vector.broadcast %31 : vector<16x1xf32> to vector<16x32xf32>
    %40 = arith.subf %6, %39 : vector<16x32xf32>
    %cst_31 = arith.constant 9.99999974E-6 : f32
    %41 = vector.broadcast %cst_31 : f32 to vector<16x1xf32>
    %42 = arith.addf %38, %41 : vector<16x1xf32>
    %43 = math.rsqrt %42 : vector<16x1xf32>
    %44 = vector.broadcast %43 : vector<16x1xf32> to vector<16x32xf32>
    %45 = arith.mulf %40, %44 : vector<16x32xf32>
    %46 = vector.broadcast %21 : vector<1x32xf32> to vector<16x32xf32>
    %47 = arith.mulf %45, %46 : vector<16x32xf32>
    %48 = vector.broadcast %22 : vector<1x32xf32> to vector<16x32xf32>
    %49 = arith.addf %47, %48 : vector<16x32xf32>
    %50 = vector.shape_cast %49 : vector<16x32xf32> to vector<2x8x32xf32>
    %51 = tpu.transpose %50, [0, 2, 1] : vector<2x8x32xf32> -> vector<2x32x8xf32>
    %52 = vector.shape_cast %51 : vector<2x32x8xf32> to vector<64x8xf32>
    %53 = arith.truncf %52 : vector<64x8xf32> to vector<64x8xbf16>
    %cst_32 = arith.constant dense<0.000000e+00> : vector<64x32xf32>
    %54 = tpu.matmul %53, %14, %cst_32 {dimension_numbers = #tpu.dot_dimension_numbers<[1], [0], [0], [1], [0, 0, 1, 1], [], []>} : vector<64x8xbf16>, vector<8x32xbf16>, vector<64x32xf32> -> vector<64x32xf32>
    %55 = vector.broadcast %26 : vector<1x32xf32> to vector<64x32xf32>
    %56 = arith.addf %54, %55 : vector<64x32xf32>
    %cst_33 = arith.constant 5.000000e-01 : f32
    %57 = vector.broadcast %cst_33 : f32 to vector<64x32xf32>
    %58 = arith.mulf %57, %56 : vector<64x32xf32>
    %cst_34 = arith.constant 4.471500e-02 : f32
    %59 = vector.broadcast %cst_34 : f32 to vector<64x32xf32>
    %60 = arith.mulf %59, %56 : vector<64x32xf32>
    %61 = arith.mulf %60, %56 : vector<64x32xf32>
    %62 = arith.mulf %61, %56 : vector<64x32xf32>
    %63 = arith.addf %56, %62 : vector<64x32xf32>
    %cst_35 = arith.constant 0.797884583 : f32
    %64 = vector.broadcast %cst_35 : f32 to vector<64x32xf32>
    %65 = arith.mulf %64, %63 : vector<64x32xf32>
    %66 = math.tanh %65 : vector<64x32xf32>
    %cst_36 = arith.constant 1.000000e+00 : f32
    %67 = vector.broadcast %cst_36 : f32 to vector<64x32xf32>
    %68 = arith.addf %67, %66 : vector<64x32xf32>
    %69 = arith.mulf %58, %68 : vector<64x32xf32>
    %70 = arith.truncf %69 : vector<64x32xf32> to vector<64x32xbf16>
    %cst_37 = arith.constant dense<0.000000e+00> : vector<64x8xf32>
    %71 = tpu.matmul %70, %16, %cst_37 {dimension_numbers = #tpu.dot_dimension_numbers<[1], [0], [0], [1], [0, 0, 1, 1], [], []>} : vector<64x32xbf16>, vector<32x8xbf16>, vector<64x8xf32> -> vector<64x8xf32>
    %72 = vector.broadcast %27 : vector<1x8xf32> to vector<64x8xf32>
    %73 = arith.addf %71, %72 : vector<64x8xf32>
    %74 = vector.shape_cast %73 : vector<64x8xf32> to vector<2x32x8xf32>
    %75 = tpu.transpose %74, [0, 2, 1] : vector<2x32x8xf32> -> vector<2x8x32xf32>
    %76 = vector.shape_cast %75 : vector<2x8x32xf32> to vector<16x32xf32>
    %77 = arith.addf %6, %76 : vector<16x32xf32>
    %cst_38 = arith.constant dense<0.000000e+00> : vector<16xf32>
    %78 = vector.multi_reduction <add>, %77, %cst_38 [1] : vector<16x32xf32> to vector<16xf32>
    %79 = vector.shape_cast %78 : vector<16xf32> to vector<16x1xf32>
    %cst_39 = arith.constant 3.200000e+01 : f32
    %80 = vector.broadcast %cst_39 : f32 to vector<16x1xf32>
    %81 = arith.divf %79, %80 : vector<16x1xf32>
    %82 = vector.broadcast %81 : vector<16x1xf32> to vector<16x32xf32>
    %83 = arith.subf %77, %82 : vector<16x32xf32>
    %84 = arith.mulf %83, %83 : vector<16x32xf32>
    %cst_40 = arith.constant dense<0.000000e+00> : vector<16xf32>
    %85 = vector.multi_reduction <add>, %84, %cst_40 [1] : vector<16x32xf32> to vector<16xf32>
    %86 = vector.shape_cast %85 : vector<16xf32> to vector<16x1xf32>
    %cst_41 = arith.constant 3.200000e+01 : f32
    %87 = vector.broadcast %cst_41 : f32 to vector<16x1xf32>
    %88 = arith.divf %86, %87 : vector<16x1xf32>
    %89 = vector.broadcast %81 : vector<16x1xf32> to vector<16x32xf32>
    %90 = arith.subf %77, %89 : vector<16x32xf32>
    %cst_42 = arith.constant 9.99999974E-6 : f32
    %91 = vector.broadcast %cst_42 : f32 to vector<16x1xf32>
    %92 = arith.addf %88, %91 : vector<16x1xf32>
    %93 = math.rsqrt %92 : vector<16x1xf32>
    %94 = vector.broadcast %93 : vector<16x1xf32> to vector<16x32xf32>
    %95 = arith.mulf %90, %94 : vector<16x32xf32>
    %96 = vector.broadcast %23 : vector<1x32xf32> to vector<16x32xf32>
    %97 = arith.mulf %95, %96 : vector<16x32xf32>
    %98 = vector.broadcast %24 : vector<1x32xf32> to vector<16x32xf32>
    %99 = arith.addf %97, %98 : vector<16x32xf32>
    %100 = arith.truncf %99 : vector<16x32xf32> to vector<16x32xbf16>
    %cst_43 = arith.constant dense<0.000000e+00> : vector<16x128xf32>
    %101 = tpu.matmul %100, %18, %cst_43 {dimension_numbers = #tpu.dot_dimension_numbers<[1], [0], [0], [1], [0, 0, 1, 1], [], []>} : vector<16x32xbf16>, vector<32x128xbf16>, vector<16x128xf32> -> vector<16x128xf32>
    %102 = vector.broadcast %12 : vector<1x128xf32> to vector<16x128xf32>
    %103 = arith.addf %101, %102 : vector<16x128xf32>
    %cst_44 = arith.constant 5.000000e-01 : f32
    %104 = vector.broadcast %cst_44 : f32 to vector<16x128xf32>
    %105 = arith.mulf %104, %103 : vector<16x128xf32>
    %cst_45 = arith.constant 4.471500e-02 : f32
    %106 = vector.broadcast %cst_45 : f32 to vector<16x128xf32>
    %107 = arith.mulf %106, %103 : vector<16x128xf32>
    %108 = arith.mulf %107, %103 : vector<16x128xf32>
    %109 = arith.mulf %108, %103 : vector<16x128xf32>
    %110 = arith.addf %103, %109 : vector<16x128xf32>
    %cst_46 = arith.constant 0.797884583 : f32
    %111 = vector.broadcast %cst_46 : f32 to vector<16x128xf32>
    %112 = arith.mulf %111, %110 : vector<16x128xf32>
    %113 = math.tanh %112 : vector<16x128xf32>
    %cst_47 = arith.constant 1.000000e+00 : f32
    %114 = vector.broadcast %cst_47 : f32 to vector<16x128xf32>
    %115 = arith.addf %114, %113 : vector<16x128xf32>
    %116 = arith.mulf %105, %115 : vector<16x128xf32>
    %117 = arith.truncf %116 : vector<16x128xf32> to vector<16x128xbf16>
    %cst_48 = arith.constant dense<0.000000e+00> : vector<16x32xf32>
    %118 = tpu.matmul %117, %20, %cst_48 {dimension_numbers = #tpu.dot_dimension_numbers<[1], [0], [0], [1], [0, 0, 1, 1], [], []>} : vector<16x128xbf16>, vector<128x32xbf16>, vector<16x32xf32> -> vector<16x32xf32>
    %119 = vector.broadcast %25 : vector<1x32xf32> to vector<16x32xf32>
    %120 = arith.addf %118, %119 : vector<16x32xf32>
    %121 = arith.addf %77, %120 : vector<16x32xf32>
    %c1 = arith.constant 1 : index
    %c0_49 = arith.constant 0 : index
    %c0_50 = arith.constant 0 : index
    %122 = vector.load %arg7[%c1, %c0_49, %c0_50] : memref<2x5x32xf32, #tpu.memory_space<vmem>>, vector<1x5x32xf32>
    %123 = vector.shape_cast %122 : vector<1x5x32xf32> to vector<5x32xf32>
    %c1_51 = arith.constant 1 : index
    %c0_52 = arith.constant 0 : index
    %c0_53 = arith.constant 0 : index
    %124 = vector.load %arg8[%c1_51, %c0_52, %c0_53] : memref<2x2x32xf32, #tpu.memory_space<vmem>>, vector<1x2x32xf32>
    %125 = vector.shape_cast %124 : vector<1x2x32xf32> to vector<2x32xf32>
    %c1_54 = arith.constant 1 : index
    %c0_55 = arith.constant 0 : index
    %c0_56 = arith.constant 0 : index
    %126 = vector.load %arg9[%c1_54, %c0_55, %c0_56] : memref<2x1x128xf32, #tpu.memory_space<vmem>>, vector<1x1x128xf32>
    %127 = vector.shape_cast %126 : vector<1x1x128xf32> to vector<1x128xf32>
    %c1_57 = arith.constant 1 : index
    %c0_58 = arith.constant 0 : index
    %c0_59 = arith.constant 0 : index
    %128 = vector.load %arg10[%c1_57, %c0_58, %c0_59] : memref<2x8x32xbf16, #tpu.memory_space<vmem>>, vector<1x8x32xbf16>
    %129 = vector.shape_cast %128 : vector<1x8x32xbf16> to vector<8x32xbf16>
    %c1_60 = arith.constant 1 : index
    %c0_61 = arith.constant 0 : index
    %c0_62 = arith.constant 0 : index
    %130 = vector.load %arg11[%c1_60, %c0_61, %c0_62] : memref<2x32x8xbf16, #tpu.memory_space<vmem>>, vector<1x32x8xbf16>
    %131 = vector.shape_cast %130 : vector<1x32x8xbf16> to vector<32x8xbf16>
    %c1_63 = arith.constant 1 : index
    %c0_64 = arith.constant 0 : index
    %c0_65 = arith.constant 0 : index
    %132 = vector.load %arg12[%c1_63, %c0_64, %c0_65] : memref<2x32x128xbf16, #tpu.memory_space<vmem>>, vector<1x32x128xbf16>
    %133 = vector.shape_cast %132 : vector<1x32x128xbf16> to vector<32x128xbf16>
    %c1_66 = arith.constant 1 : index
    %c0_67 = arith.constant 0 : index
    %c0_68 = arith.constant 0 : index
    %134 = vector.load %arg13[%c1_66, %c0_67, %c0_68] : memref<2x128x32xbf16, #tpu.memory_space<vmem>>, vector<1x128x32xbf16>
    %135 = vector.shape_cast %134 : vector<1x128x32xbf16> to vector<128x32xbf16>
    %136 = vector.extract_strided_slice %123 {offsets = [0, 0], sizes = [1, 32], strides = [1, 1]} : vector<5x32xf32> to vector<1x32xf32>
    %137 = vector.extract_strided_slice %123 {offsets = [1, 0], sizes = [1, 32], strides = [1, 1]} : vector<5x32xf32> to vector<1x32xf32>
    %138 = vector.extract_strided_slice %123 {offsets = [2, 0], sizes = [1, 32], strides = [1, 1]} : vector<5x32xf32> to vector<1x32xf32>
    %139 = vector.extract_strided_slice %123 {offsets = [3, 0], sizes = [1, 32], strides = [1, 1]} : vector<5x32xf32> to vector<1x32xf32>
    %140 = vector.extract_strided_slice %123 {offsets = [4, 0], sizes = [1, 32], strides = [1, 1]} : vector<5x32xf32> to vector<1x32xf32>
    %141 = vector.extract_strided_slice %125 {offsets = [0, 0], sizes = [1, 32], strides = [1, 1]} : vector<2x32xf32> to vector<1x32xf32>
    %142 = vector.extract_strided_slice %125 {offsets = [1, 0], sizes = [1, 8], strides = [1, 1]} : vector<2x32xf32> to vector<1x8xf32>
    %cst_69 = arith.constant dense<0.000000e+00> : vector<16xf32>
    %143 = vector.multi_reduction <add>, %121, %cst_69 [1] : vector<16x32xf32> to vector<16xf32>
    %144 = vector.shape_cast %143 : vector<16xf32> to vector<16x1xf32>
    %cst_70 = arith.constant 3.200000e+01 : f32
    %145 = vector.broadcast %cst_70 : f32 to vector<16x1xf32>
    %146 = arith.divf %144, %145 : vector<16x1xf32>
    %147 = vector.broadcast %146 : vector<16x1xf32> to vector<16x32xf32>
    %148 = arith.subf %121, %147 : vector<16x32xf32>
    %149 = arith.mulf %148, %148 : vector<16x32xf32>
    %cst_71 = arith.constant dense<0.000000e+00> : vector<16xf32>
    %150 = vector.multi_reduction <add>, %149, %cst_71 [1] : vector<16x32xf32> to vector<16xf32>
    %151 = vector.shape_cast %150 : vector<16xf32> to vector<16x1xf32>
    %cst_72 = arith.constant 3.200000e+01 : f32
    %152 = vector.broadcast %cst_72 : f32 to vector<16x1xf32>
    %153 = arith.divf %151, %152 : vector<16x1xf32>
    %154 = vector.broadcast %146 : vector<16x1xf32> to vector<16x32xf32>
    %155 = arith.subf %121, %154 : vector<16x32xf32>
    %cst_73 = arith.constant 9.99999974E-6 : f32
    %156 = vector.broadcast %cst_73 : f32 to vector<16x1xf32>
    %157 = arith.addf %153, %156 : vector<16x1xf32>
    %158 = math.rsqrt %157 : vector<16x1xf32>
    %159 = vector.broadcast %158 : vector<16x1xf32> to vector<16x32xf32>
    %160 = arith.mulf %155, %159 : vector<16x32xf32>
    %161 = vector.broadcast %136 : vector<1x32xf32> to vector<16x32xf32>
    %162 = arith.mulf %160, %161 : vector<16x32xf32>
    %163 = vector.broadcast %137 : vector<1x32xf32> to vector<16x32xf32>
    %164 = arith.addf %162, %163 : vector<16x32xf32>
    %165 = vector.shape_cast %164 : vector<16x32xf32> to vector<2x8x32xf32>
    %166 = tpu.transpose %165, [0, 2, 1] : vector<2x8x32xf32> -> vector<2x32x8xf32>
    %167 = vector.shape_cast %166 : vector<2x32x8xf32> to vector<64x8xf32>
    %168 = arith.truncf %167 : vector<64x8xf32> to vector<64x8xbf16>
    %cst_74 = arith.constant dense<0.000000e+00> : vector<64x32xf32>
    %169 = tpu.matmul %168, %129, %cst_74 {dimension_numbers = #tpu.dot_dimension_numbers<[1], [0], [0], [1], [0, 0, 1, 1], [], []>} : vector<64x8xbf16>, vector<8x32xbf16>, vector<64x32xf32> -> vector<64x32xf32>
    %170 = vector.broadcast %141 : vector<1x32xf32> to vector<64x32xf32>
    %171 = arith.addf %169, %170 : vector<64x32xf32>
    %cst_75 = arith.constant 5.000000e-01 : f32
    %172 = vector.broadcast %cst_75 : f32 to vector<64x32xf32>
    %173 = arith.mulf %172, %171 : vector<64x32xf32>
    %cst_76 = arith.constant 4.471500e-02 : f32
    %174 = vector.broadcast %cst_76 : f32 to vector<64x32xf32>
    %175 = arith.mulf %174, %171 : vector<64x32xf32>
    %176 = arith.mulf %175, %171 : vector<64x32xf32>
    %177 = arith.mulf %176, %171 : vector<64x32xf32>
    %178 = arith.addf %171, %177 : vector<64x32xf32>
    %cst_77 = arith.constant 0.797884583 : f32
    %179 = vector.broadcast %cst_77 : f32 to vector<64x32xf32>
    %180 = arith.mulf %179, %178 : vector<64x32xf32>
    %181 = math.tanh %180 : vector<64x32xf32>
    %cst_78 = arith.constant 1.000000e+00 : f32
    %182 = vector.broadcast %cst_78 : f32 to vector<64x32xf32>
    %183 = arith.addf %182, %181 : vector<64x32xf32>
    %184 = arith.mulf %173, %183 : vector<64x32xf32>
    %185 = arith.truncf %184 : vector<64x32xf32> to vector<64x32xbf16>
    %cst_79 = arith.constant dense<0.000000e+00> : vector<64x8xf32>
    %186 = tpu.matmul %185, %131, %cst_79 {dimension_numbers = #tpu.dot_dimension_numbers<[1], [0], [0], [1], [0, 0, 1, 1], [], []>} : vector<64x32xbf16>, vector<32x8xbf16>, vector<64x8xf32> -> vector<64x8xf32>
    %187 = vector.broadcast %142 : vector<1x8xf32> to vector<64x8xf32>
    %188 = arith.addf %186, %187 : vector<64x8xf32>
    %189 = vector.shape_cast %188 : vector<64x8xf32> to vector<2x32x8xf32>
    %190 = tpu.transpose %189, [0, 2, 1] : vector<2x32x8xf32> -> vector<2x8x32xf32>
    %191 = vector.shape_cast %190 : vector<2x8x32xf32> to vector<16x32xf32>
    %192 = arith.addf %121, %191 : vector<16x32xf32>
    %cst_80 = arith.constant dense<0.000000e+00> : vector<16xf32>
    %193 = vector.multi_reduction <add>, %192, %cst_80 [1] : vector<16x32xf32> to vector<16xf32>
    %194 = vector.shape_cast %193 : vector<16xf32> to vector<16x1xf32>
    %cst_81 = arith.constant 3.200000e+01 : f32
    %195 = vector.broadcast %cst_81 : f32 to vector<16x1xf32>
    %196 = arith.divf %194, %195 : vector<16x1xf32>
    %197 = vector.broadcast %196 : vector<16x1xf32> to vector<16x32xf32>
    %198 = arith.subf %192, %197 : vector<16x32xf32>
    %199 = arith.mulf %198, %198 : vector<16x32xf32>
    %cst_82 = arith.constant dense<0.000000e+00> : vector<16xf32>
    %200 = vector.multi_reduction <add>, %199, %cst_82 [1] : vector<16x32xf32> to vector<16xf32>
    %201 = vector.shape_cast %200 : vector<16xf32> to vector<16x1xf32>
    %cst_83 = arith.constant 3.200000e+01 : f32
    %202 = vector.broadcast %cst_83 : f32 to vector<16x1xf32>
    %203 = arith.divf %201, %202 : vector<16x1xf32>
    %204 = vector.broadcast %196 : vector<16x1xf32> to vector<16x32xf32>
    %205 = arith.subf %192, %204 : vector<16x32xf32>
    %cst_84 = arith.constant 9.99999974E-6 : f32
    %206 = vector.broadcast %cst_84 : f32 to vector<16x1xf32>
    %207 = arith.addf %203, %206 : vector<16x1xf32>
    %208 = math.rsqrt %207 : vector<16x1xf32>
    %209 = vector.broadcast %208 : vector<16x1xf32> to vector<16x32xf32>
    %210 = arith.mulf %205, %209 : vector<16x32xf32>
    %211 = vector.broadcast %138 : vector<1x32xf32> to vector<16x32xf32>
    %212 = arith.mulf %210, %211 : vector<16x32xf32>
    %213 = vector.broadcast %139 : vector<1x32xf32> to vector<16x32xf32>
    %214 = arith.addf %212, %213 : vector<16x32xf32>
    %215 = arith.truncf %214 : vector<16x32xf32> to vector<16x32xbf16>
    %cst_85 = arith.constant dense<0.000000e+00> : vector<16x128xf32>
    %216 = tpu.matmul %215, %133, %cst_85 {dimension_numbers = #tpu.dot_dimension_numbers<[1], [0], [0], [1], [0, 0, 1, 1], [], []>} : vector<16x32xbf16>, vector<32x128xbf16>, vector<16x128xf32> -> vector<16x128xf32>
    %217 = vector.broadcast %127 : vector<1x128xf32> to vector<16x128xf32>
    %218 = arith.addf %216, %217 : vector<16x128xf32>
    %cst_86 = arith.constant 5.000000e-01 : f32
    %219 = vector.broadcast %cst_86 : f32 to vector<16x128xf32>
    %220 = arith.mulf %219, %218 : vector<16x128xf32>
    %cst_87 = arith.constant 4.471500e-02 : f32
    %221 = vector.broadcast %cst_87 : f32 to vector<16x128xf32>
    %222 = arith.mulf %221, %218 : vector<16x128xf32>
    %223 = arith.mulf %222, %218 : vector<16x128xf32>
    %224 = arith.mulf %223, %218 : vector<16x128xf32>
    %225 = arith.addf %218, %224 : vector<16x128xf32>
    %cst_88 = arith.constant 0.797884583 : f32
    %226 = vector.broadcast %cst_88 : f32 to vector<16x128xf32>
    %227 = arith.mulf %226, %225 : vector<16x128xf32>
    %228 = math.tanh %227 : vector<16x128xf32>
    %cst_89 = arith.constant 1.000000e+00 : f32
    %229 = vector.broadcast %cst_89 : f32 to vector<16x128xf32>
    %230 = arith.addf %229, %228 : vector<16x128xf32>
    %231 = arith.mulf %220, %230 : vector<16x128xf32>
    %232 = arith.truncf %231 : vector<16x128xf32> to vector<16x128xbf16>
    %cst_90 = arith.constant dense<0.000000e+00> : vector<16x32xf32>
    %233 = tpu.matmul %232, %135, %cst_90 {dimension_numbers = #tpu.dot_dimension_numbers<[1], [0], [0], [1], [0, 0, 1, 1], [], []>} : vector<16x128xbf16>, vector<128x32xbf16>, vector<16x32xf32> -> vector<16x32xf32>
    %234 = vector.broadcast %140 : vector<1x32xf32> to vector<16x32xf32>
    %235 = arith.addf %233, %234 : vector<16x32xf32>
    %236 = arith.addf %192, %235 : vector<16x32xf32>
    %c0_91 = arith.constant 0 : index
    %c0_92 = arith.constant 0 : index
    %237 = vector.load %arg4[%c0_91, %c0_92] : memref<2x32xf32, #tpu.memory_space<vmem>>, vector<2x32xf32>
    %c0_93 = arith.constant 0 : index
    %c0_94 = arith.constant 0 : index
    %238 = vector.load %arg5[%c0_93, %c0_94] : memref<32x3xbf16, #tpu.memory_space<vmem>>, vector<32x3xbf16>
    %c0_95 = arith.constant 0 : index
    %c0_96 = arith.constant 0 : index
    %239 = vector.load %arg6[%c0_95, %c0_96] : memref<1x3xf32, #tpu.memory_space<vmem>>, vector<1x3xf32>
    %240 = vector.extract_strided_slice %237 {offsets = [0, 0], sizes = [1, 32], strides = [1, 1]} : vector<2x32xf32> to vector<1x32xf32>
    %241 = vector.extract_strided_slice %237 {offsets = [1, 0], sizes = [1, 32], strides = [1, 1]} : vector<2x32xf32> to vector<1x32xf32>
    %cst_97 = arith.constant dense<0.000000e+00> : vector<16xf32>
    %242 = vector.multi_reduction <add>, %236, %cst_97 [1] : vector<16x32xf32> to vector<16xf32>
    %243 = vector.shape_cast %242 : vector<16xf32> to vector<16x1xf32>
    %cst_98 = arith.constant 3.200000e+01 : f32
    %244 = vector.broadcast %cst_98 : f32 to vector<16x1xf32>
    %245 = arith.divf %243, %244 : vector<16x1xf32>
    %246 = vector.broadcast %245 : vector<16x1xf32> to vector<16x32xf32>
    %247 = arith.subf %236, %246 : vector<16x32xf32>
    %248 = arith.mulf %247, %247 : vector<16x32xf32>
    %cst_99 = arith.constant dense<0.000000e+00> : vector<16xf32>
    %249 = vector.multi_reduction <add>, %248, %cst_99 [1] : vector<16x32xf32> to vector<16xf32>
    %250 = vector.shape_cast %249 : vector<16xf32> to vector<16x1xf32>
    %cst_100 = arith.constant 3.200000e+01 : f32
    %251 = vector.broadcast %cst_100 : f32 to vector<16x1xf32>
    %252 = arith.divf %250, %251 : vector<16x1xf32>
    %253 = vector.broadcast %245 : vector<16x1xf32> to vector<16x32xf32>
    %254 = arith.subf %236, %253 : vector<16x32xf32>
    %cst_101 = arith.constant 9.99999974E-6 : f32
    %255 = vector.broadcast %cst_101 : f32 to vector<16x1xf32>
    %256 = arith.addf %252, %255 : vector<16x1xf32>
    %257 = math.rsqrt %256 : vector<16x1xf32>
    %258 = vector.broadcast %257 : vector<16x1xf32> to vector<16x32xf32>
    %259 = arith.mulf %254, %258 : vector<16x32xf32>
    %260 = vector.broadcast %240 : vector<1x32xf32> to vector<16x32xf32>
    %261 = arith.mulf %259, %260 : vector<16x32xf32>
    %262 = vector.broadcast %241 : vector<1x32xf32> to vector<16x32xf32>
    %263 = arith.addf %261, %262 : vector<16x32xf32>
    %264 = vector.shape_cast %263 : vector<16x32xf32> to vector<2x8x32xf32>
    %cst_102 = arith.constant dense<0.000000e+00> : vector<2x32xf32>
    %265 = vector.multi_reduction <add>, %264, %cst_102 [1] : vector<2x8x32xf32> to vector<2x32xf32>
    %cst_103 = arith.constant 8.000000e+00 : f32
    %266 = vector.broadcast %cst_103 : f32 to vector<2x32xf32>
    %267 = arith.divf %265, %266 : vector<2x32xf32>
    %268 = arith.truncf %267 : vector<2x32xf32> to vector<2x32xbf16>
    %cst_104 = arith.constant dense<0.000000e+00> : vector<2x3xf32>
    %269 = tpu.matmul %268, %238, %cst_104 {dimension_numbers = #tpu.dot_dimension_numbers<[1], [0], [0], [1], [0, 0, 1, 1], [], []>} : vector<2x32xbf16>, vector<32x3xbf16>, vector<2x3xf32> -> vector<2x3xf32>
    %270 = vector.broadcast %239 : vector<1x3xf32> to vector<2x3xf32>
    %271 = arith.addf %269, %270 : vector<2x3xf32>
    %272 = arith.negf %271 : vector<2x3xf32>
    %273 = math.exp %272 : vector<2x3xf32>
    %cst_105 = arith.constant 1.000000e+00 : f32
    %274 = vector.broadcast %cst_105 : f32 to vector<2x3xf32>
    %275 = arith.addf %274, %273 : vector<2x3xf32>
    %276 = arith.divf %274, %275 : vector<2x3xf32>
    %c0_106 = arith.constant 0 : index
    %c0_107 = arith.constant 0 : index
    %277 = vector.load %arg14[%c0_106, %c0_107] : memref<2x3xf32, #tpu.memory_space<vmem>>, vector<2x3xf32>
    tpu.vector_store %arg14[%c0_106, %c0_107], %276 {strides = array<i32>} : memref<2x3xf32, #tpu.memory_space<vmem>>, vector<2x3xf32>,
    return
  }
  func.func @transform_0(%arg0: i32) -> (i32, i32, i32) {
    %c0_i32 = arith.constant 0 : i32
    %c0_i32_0 = arith.constant 0 : i32
    %c0_i32_1 = arith.constant 0 : i32
    return %arg0, %c0_i32, %c0_i32_0 : i32, i32, i32
  }
  func.func @transform_1(%arg0: i32) -> (i32, i32) {
    %c0_i32 = arith.constant 0 : i32
    %c0_i32_0 = arith.constant 0 : i32
    %c0_i32_1 = arith.constant 0 : i32
    return %c0_i32, %c0_i32_0 : i32, i32
  }
  func.func @transform_2(%arg0: i32) -> (i32, i32) {
    %c0_i32 = arith.constant 0 : i32
    %c0_i32_0 = arith.constant 0 : i32
    %c0_i32_1 = arith.constant 0 : i32
    return %c0_i32, %c0_i32_0 : i32, i32
  }
  func.func @transform_3(%arg0: i32) -> (i32, i32) {
    %c0_i32 = arith.constant 0 : i32
    %c0_i32_0 = arith.constant 0 : i32
    %c0_i32_1 = arith.constant 0 : i32
    return %c0_i32, %c0_i32_0 : i32, i32
  }
  func.func @transform_4(%arg0: i32) -> (i32, i32) {
    %c0_i32 = arith.constant 0 : i32
    %c0_i32_0 = arith.constant 0 : i32
    %c0_i32_1 = arith.constant 0 : i32
    return %c0_i32, %c0_i32_0 : i32, i32
  }
  func.func @transform_5(%arg0: i32) -> (i32, i32) {
    %c0_i32 = arith.constant 0 : i32
    %c0_i32_0 = arith.constant 0 : i32
    %c0_i32_1 = arith.constant 0 : i32
    return %c0_i32, %c0_i32_0 : i32, i32
  }
  func.func @transform_6(%arg0: i32) -> (i32, i32, i32) {
    %c0_i32 = arith.constant 0 : i32
    %c0_i32_0 = arith.constant 0 : i32
    %c0_i32_1 = arith.constant 0 : i32
    %c0_i32_2 = arith.constant 0 : i32
    return %c0_i32, %c0_i32_0, %c0_i32_1 : i32, i32, i32
  }
  func.func @transform_7(%arg0: i32) -> (i32, i32, i32) {
    %c0_i32 = arith.constant 0 : i32
    %c0_i32_0 = arith.constant 0 : i32
    %c0_i32_1 = arith.constant 0 : i32
    %c0_i32_2 = arith.constant 0 : i32
    return %c0_i32, %c0_i32_0, %c0_i32_1 : i32, i32, i32
  }
  func.func @transform_8(%arg0: i32) -> (i32, i32, i32) {
    %c0_i32 = arith.constant 0 : i32
    %c0_i32_0 = arith.constant 0 : i32
    %c0_i32_1 = arith.constant 0 : i32
    %c0_i32_2 = arith.constant 0 : i32
    return %c0_i32, %c0_i32_0, %c0_i32_1 : i32, i32, i32
  }
  func.func @transform_9(%arg0: i32) -> (i32, i32, i32) {
    %c0_i32 = arith.constant 0 : i32
    %c0_i32_0 = arith.constant 0 : i32
    %c0_i32_1 = arith.constant 0 : i32
    %c0_i32_2 = arith.constant 0 : i32
    return %c0_i32, %c0_i32_0, %c0_i32_1 : i32, i32, i32
  }
  func.func @transform_10(%arg0: i32) -> (i32, i32, i32) {
    %c0_i32 = arith.constant 0 : i32
    %c0_i32_0 = arith.constant 0 : i32
    %c0_i32_1 = arith.constant 0 : i32
    %c0_i32_2 = arith.constant 0 : i32
    return %c0_i32, %c0_i32_0, %c0_i32_1 : i32, i32, i32
  }
  func.func @transform_11(%arg0: i32) -> (i32, i32, i32) {
    %c0_i32 = arith.constant 0 : i32
    %c0_i32_0 = arith.constant 0 : i32
    %c0_i32_1 = arith.constant 0 : i32
    %c0_i32_2 = arith.constant 0 : i32
    return %c0_i32, %c0_i32_0, %c0_i32_1 : i32, i32, i32
  }
  func.func @transform_12(%arg0: i32) -> (i32, i32, i32) {
    %c0_i32 = arith.constant 0 : i32
    %c0_i32_0 = arith.constant 0 : i32
    %c0_i32_1 = arith.constant 0 : i32
    %c0_i32_2 = arith.constant 0 : i32
    return %c0_i32, %c0_i32_0, %c0_i32_1 : i32, i32, i32
  }
  func.func @transform_13(%arg0: i32) -> (i32, i32) {
    %c0_i32 = arith.constant 0 : i32
    %c0_i32_0 = arith.constant 0 : i32
    return %arg0, %c0_i32 : i32, i32
  }
}

</mosaic_0001>

<llo_original>
// kernel: tpu_custom_call.1
$region0: #{tpu_custom_call.1}
  #allocation0 [shape = 'u32[]', space=smem, size = 0x4, offset = 0x4, fixed_abs, tag = 'smem constant byte address 0x4 - core index']
  #allocation1 [shape = 'u32[144,128]{1,0:T(1,128)}', space=vmem, size = 0x12000, scoped, tag = 'internal scratch']
  %s0 = inlined_call_operand.vmem [shape: bf16[2,8,32], index: 0, kind: input, shape index: {}]
  %s1 = inlined_call_operand.vmem [shape: bf16[32,32], index: 1, kind: input, shape index: {}]
  %s2 = inlined_call_operand.vmem [shape: f32[1,32], index: 2, kind: input, shape index: {}]
  %s3 = inlined_call_operand.vmem [shape: f32[2,32], index: 3, kind: input, shape index: {}]
  %s4 = inlined_call_operand.vmem [shape: bf16[32,3], index: 4, kind: input, shape index: {}]
  %s5 = inlined_call_operand.vmem [shape: f32[1,3], index: 5, kind: input, shape index: {}]
  %s6 = inlined_call_operand.vmem [shape: f32[2,5,32], index: 6, kind: input, shape index: {}]
  %s7 = inlined_call_operand.vmem [shape: f32[2,2,32], index: 7, kind: input, shape index: {}]
  %s8 = inlined_call_operand.vmem [shape: f32[2,1,128], index: 8, kind: input, shape index: {}]
  %s9 = inlined_call_operand.vmem [shape: bf16[2,8,32], index: 9, kind: input, shape index: {}]
  %s10 = inlined_call_operand.vmem [shape: bf16[2,32,8], index: 10, kind: input, shape index: {}]
  %s11 = inlined_call_operand.vmem [shape: bf16[2,32,128], index: 11, kind: input, shape index: {}]
  %s12 = inlined_call_operand.vmem [shape: bf16[2,128,32], index: 12, kind: input, shape index: {}]
  %s13 = inlined_call_operand.hbm [shape: f32[2,3], index: 13, kind: output, shape index: {}]
  %s14 = sld [smem:[#allocation0]]
  $region62: #{tpu_custom_call.1} parent=0
    _
  %s16 = ssub.s32 1, %s14
  %s17 = scalar_select 0, %s16, %s14
  $region1: #{tpu_custom_call.1} parent=0
    #allocation2 [shape = 'u8[1024]{0}', space=vmem, size = 0x400, scoped, tag = 'output window, operand 0, single buffered']
    #allocation3 [shape = 's32[1]{0}', space=sflag, size = 0x4, scoped, tag = 'scoped memory for tpu_custom_call.1']
    %18 = vsyncpa [#allocation3], 0
    // Predicated region
    $region2: #{tpu_custom_call.1} parent=1 // pred_check
      _
    $region3: #{tpu_custom_call.1} parent=1 // pred_check_branch
      %20 = sbr.rel (0) target = $region5
    $region4: #{tpu_custom_call.1} parent=1 // pred_region
      _
    $region5: #{tpu_custom_call.1} parent=1 // pred_fallthru
      _
    // Predicated region
    $region6: #{tpu_custom_call.1} parent=1 // pred_check
      _
    $region7: #{tpu_custom_call.1} parent=1 // pred_check_branch
      %22 = sbr.rel (0) target = $region9
    $region8: #{tpu_custom_call.1} parent=1 // pred_region
      _
    $region9: #{tpu_custom_call.1} parent=1 // pred_fallthru
      _
    // Predicated region
    $region10: #{tpu_custom_call.1} parent=1 // pred_check
      _
    $region11: #{tpu_custom_call.1} parent=1 // pred_check_branch
      %24 = sbr.rel (0) target = $region13
    $region12: #{tpu_custom_call.1} parent=1 // pred_region
      _
    $region13: #{tpu_custom_call.1} parent=1 // pred_fallthru
      _
    // Predicated region
    $region14: #{tpu_custom_call.1} parent=1 // pred_check
      _
    $region15: #{tpu_custom_call.1} parent=1 // pred_check_branch
      %26 = sbr.rel (0) target = $region17
    $region16: #{tpu_custom_call.1} parent=1 // pred_region
      _
    $region17: #{tpu_custom_call.1} parent=1 // pred_fallthru
      _
    // Predicated region
    $region18: #{tpu_custom_call.1} parent=1 // pred_check
      _
    $region19: #{tpu_custom_call.1} parent=1 // pred_check_branch
      %28 = sbr.rel (0) target = $region21
    $region20: #{tpu_custom_call.1} parent=1 // pred_region
      _
    $region21: #{tpu_custom_call.1} parent=1 // pred_fallthru
      _
    // Predicated region
    $region22: #{tpu_custom_call.1} parent=1 // pred_check
      _
    $region23: #{tpu_custom_call.1} parent=1 // pred_check_branch
      %30 = sbr.rel (0) target = $region25
    $region24: #{tpu_custom_call.1} parent=1 // pred_region
      _
    $region25: #{tpu_custom_call.1} parent=1 // pred_fallthru
      _
    // Predicated region
    $region26: #{tpu_custom_call.1} parent=1 // pred_check
      _
    $region27: #{tpu_custom_call.1} parent=1 // pred_check_branch
      %32 = sbr.rel (0) target = $region29
    $region28: #{tpu_custom_call.1} parent=1 // pred_region
      _
    $region29: #{tpu_custom_call.1} parent=1 // pred_fallthru
      _
    // Predicated region
    $region30: #{tpu_custom_call.1} parent=1 // pred_check
      _
    $region31: #{tpu_custom_call.1} parent=1 // pred_check_branch
      %34 = sbr.rel (0) target = $region33
    $region32: #{tpu_custom_call.1} parent=1 // pred_region
      _
    $region33: #{tpu_custom_call.1} parent=1 // pred_fallthru
      _
    // Predicated region
    $region34: #{tpu_custom_call.1} parent=1 // pred_check
      _
    $region35: #{tpu_custom_call.1} parent=1 // pred_check_branch
      %36 = sbr.rel (0) target = $region37
    $region36: #{tpu_custom_call.1} parent=1 // pred_region
      _
    $region37: #{tpu_custom_call.1} parent=1 // pred_fallthru
      _
    // Predicated region
    $region38: #{tpu_custom_call.1} parent=1 // pred_check
      _
    $region39: #{tpu_custom_call.1} parent=1 // pred_check_branch
      %38 = sbr.rel (0) target = $region41
    $region40: #{tpu_custom_call.1} parent=1 // pred_region
      _
    $region41: #{tpu_custom_call.1} parent=1 // pred_fallthru
      _
    // Predicated region
    $region42: #{tpu_custom_call.1} parent=1 // pred_check
      _
    $region43: #{tpu_custom_call.1} parent=1 // pred_check_branch
      %40 = sbr.rel (0) target = $region45
    $region44: #{tpu_custom_call.1} parent=1 // pred_region
      _
    $region45: #{tpu_custom_call.1} parent=1 // pred_fallthru
      _
    // Predicated region
    $region46: #{tpu_custom_call.1} parent=1 // pred_check
      _
    $region47: #{tpu_custom_call.1} parent=1 // pred_check_branch
      %42 = sbr.rel (0) target = $region49
    $region48: #{tpu_custom_call.1} parent=1 // pred_region
      _
    $region49: #{tpu_custom_call.1} parent=1 // pred_fallthru
      _
    // Predicated region
    $region50: #{tpu_custom_call.1} parent=1 // pred_check
      _
    $region51: #{tpu_custom_call.1} parent=1 // pred_check_branch
      %44 = sbr.rel (0) target = $region53
    $region52: #{tpu_custom_call.1} parent=1 // pred_region
      _
    $region53: #{tpu_custom_call.1} parent=1 // pred_fallthru
      _
    %v46 = vld [vmem:[%s0] sm:$0xf]
    %v47 = vld [vmem:[%s0 + $0x4] sm:$0xf]
    %v48 = vld [vmem:[%s1] sm:$0xf]
    %v49 = vld [vmem:[%s1 + $0x4] sm:$0xf]
    %v50 = vld [vmem:[%s1 + $0x8] sm:$0xf]
    %v51 = vld [vmem:[%s1 + $0xc] sm:$0xf]
    %v52 = vld [vmem:[%s2] sm:$0x1]
    %v54 = vlaneseq
    %v55 = vshrl.u32 %v54, 7
    %v56 = vsub.s32 0, %v55
    %v57 = vrot.slane %v52, %v56
    %v61 = vunpack.c.l.b16 %v46
    %v62 = vunpack.c.l.b16 %v47
    %v63 = vpack.c.b16 %v62, %v61
    %v68 = vunpack.c.l.b16 %v48
    %v69 = vunpack.c.l.b16 %v49
    %v70 = vunpack.c.l.b16 %v50
    %v71 = vunpack.c.l.b16 %v51
    %v72 = vpack.c.b16 %v69, %v68
    %v73 = vpack.c.b16 %v71, %v70
    %vm76 = vcmask 261120
    %v78 = vsel %vm76, %v63, 0
    %80 = vmatprep.subr.bf16.mxu0 0
    %81 = vmatpush1.bf16.msra.mxu0 %v72
    %82 = vmatprep.subr.bf16.mxu0 0
    %83 = vmatpush1.bf16.msra.mxu0 %v73
    %84 = vmatprep.subr.bf16.mxu0 0
    %85 = vmatpush1.bf16.msra.mxu0 0
    %86 = vmatprep.subr.bf16.mxu0 0
    %87 = vmatpush1.bf16.msra.mxu0 0
    %88 = vmatprep.subr.bf16.mxu0 0
    %89 = vmatpush1.bf16.msra.mxu0 0
    %90 = vmatprep.subr.bf16.mxu0 0
    %91 = vmatpush1.bf16.msra.mxu0 0
    %92 = vmatprep.subr.bf16.mxu0 0
    %93 = vmatpush1.bf16.msra.mxu0 0
    %94 = vmatprep.subr.bf16.mxu0 0
    %95 = vmatpush1.bf16.msra.mxu0 0
    %96 = vmatprep.subr.bf16.mxu0 0
    %97 = vmatpush1.bf16.msra.mxu0 0
    %98 = vmatprep.subr.bf16.mxu0 0
    %99 = vmatpush1.bf16.msra.mxu0 0
    %100 = vmatprep.subr.bf16.mxu0 0
    %101 = vmatpush1.bf16.msra.mxu0 0
    %102 = vmatprep.subr.bf16.mxu0 0
    %103 = vmatpush1.bf16.msra.mxu0 0
    %104 = vmatprep.subr.bf16.mxu0 0
    %105 = vmatpush1.bf16.msra.mxu0 0
    %106 = vmatprep.subr.bf16.mxu0 0
    %107 = vmatpush1.bf16.msra.mxu0 0
    %108 = vmatprep.subr.bf16.mxu0 0
    %109 = vmatpush1.bf16.msra.mxu0 0
    %110 = vmatprep.subr.bf16.mxu0 0
    %111 = vmatpush1.bf16.msra.mxu0 0
    %112 = vmatprep.mubr.bf16.mxu0 0
    %113 = vmatmul.mubr.bf16.gmra.mrb[0].mxu0 %v78
    %v114 = vpop.f32.mrb[0].mxu0
    %v115 = vadd.f32 %v57, %v114
    %v116 = vpop.f32.mrb[0].mxu0
    %v117 = vpop.f32.mrb[0].mxu0
    %v118 = vadd.f32 %v57, %v117
    %v119 = vpop.f32.mrb[0].mxu0
    %120 = vdwg.mxu0
    %v121 = vld [vmem:[%s6] sm:$0x1f]
    %v122 = vld [vmem:[%s7] sm:$0x3]
    %v123 = vld [vmem:[%s8] sm:$0x1]
    %v124 = vld [vmem:[%s9] sm:$0xf]
    %v125 = vld [vmem:[%s10] sm:$0xf]
    %v126 = vld [vmem:[%s10 + $0x4] sm:$0xf]
    %v127 = vld [vmem:[%s10 + $0x8] sm:$0xf]
    %v128 = vld [vmem:[%s10 + $0xc] sm:$0xf]
    %v129 = vld [vmem:[%s11] sm:$0xf]
    %v130 = vld [vmem:[%s11 + $0x4] sm:$0xf]
    %v131 = vld [vmem:[%s11 + $0x8] sm:$0xf]
    %v132 = vld [vmem:[%s11 + $0xc] sm:$0xf]
    %v133 = vld [vmem:[%s12] sm:$0xf]
    %v134 = vld [vmem:[%s12 + $0x4] sm:$0xf]
    %v135 = vld [vmem:[%s12 + $0x8] sm:$0xf]
    %v136 = vld [vmem:[%s12 + $0xc] sm:$0xf]
    %v137 = vld [vmem:[%s12 + $0x10] sm:$0xf]
    %v138 = vld [vmem:[%s12 + $0x14] sm:$0xf]
    %v139 = vld [vmem:[%s12 + $0x18] sm:$0xf]
    %v140 = vld [vmem:[%s12 + $0x1c] sm:$0xf]
    %v141 = vld [vmem:[%s12 + $0x20] sm:$0xf]
    %v142 = vld [vmem:[%s12 + $0x24] sm:$0xf]
    %v143 = vld [vmem:[%s12 + $0x28] sm:$0xf]
    %v144 = vld [vmem:[%s12 + $0x2c] sm:$0xf]
    %v145 = vld [vmem:[%s12 + $0x30] sm:$0xf]
    %v146 = vld [vmem:[%s12 + $0x34] sm:$0xf]
    %v147 = vld [vmem:[%s12 + $0x38] sm:$0xf]
    %v148 = vld [vmem:[%s12 + $0x3c] sm:$0xf]
    %v149 = vsel %vm76, %v115, 0.0
    %150 = vadd.xlane.f32.xlu0 %v149
    %v151 = vpop.xlane.xlu0 %150
    %v152 = vsel %vm76, %v118, 0.0
    %153 = vadd.xlane.f32.xlu0 %v152
    %v154 = vpop.xlane.xlu0 %153
    %v155 = vrcp.pop 32.0
    %v156 = vmul.f32 %v151, %v155
    %v157 = vmul.f32 %v154, %v155
    %v158 = vsub.f32 %v115, %v156
    %v159 = vsub.f32 %v118, %v157
    %v160 = vmul.f32 %v158, %v158
    %v161 = vmul.f32 %v159, %v159
    %v162 = vsel %vm76, %v160, 0.0
    %163 = vadd.xlane.f32.xlu0 %v162
    %v164 = vpop.xlane.xlu0 %163
    %v165 = vsel %vm76, %v161, 0.0
    %166 = vadd.xlane.f32.xlu0 %v165
    %v167 = vpop.xlane.xlu0 %166
    %v168 = vmul.f32 %v164, %v155
    %v169 = vmul.f32 %v167, %v155
    %v170 = vadd.f32 %v168, 1e-05
    %v171 = vadd.f32 %v169, 1e-05
    %v172 = vrsqrt.pop %v170
    %v173 = vrsqrt.pop %v171
    %v174 = vmul.f32 %v158, %v172
    %v175 = vmul.f32 %v159, %v173
    %v176 = vlaneseq
    %v177 = vshrl.u32 %v176, 7
    %v178 = vsub.s32 0, %v177
    %v179 = vrot.slane %v121, %v178
    %v180 = vmul.f32 %v174, %v179
    %v181 = vmul.f32 %v175, %v179
    %v182 = vlaneseq
    %v183 = vshrl.u32 %v182, 7
    %v184 = vsub.s32 1, %v183
    %v185 = vrot.slane %v121, %v184
    %v186 = vadd.f32 %v180, %v185
    %v187 = vadd.f32 %v181, %v185
    %188 = vxpose.xlu0.b32.start [1/16] %v186, 128
    %189 = vxpose.xlu0.b32.cont [2/16] 0.0, 128
    %190 = vxpose.xlu0.b32.cont [3/16] 0.0, 128
    %191 = vxpose.xlu0.b32.cont [4/16] 0.0, 128
    %192 = vxpose.xlu0.b32.cont [5/16] 0.0, 128
    %193 = vxpose.xlu0.b32.cont [6/16] 0.0, 128
    %194 = vxpose.xlu0.b32.cont [7/16] 0.0, 128
    %195 = vxpose.xlu0.b32.cont [8/16] 0.0, 128
    %196 = vxpose.xlu0.b32.cont [9/16] 0.0, 128
    %197 = vxpose.xlu0.b32.cont [10/16] 0.0, 128
    %198 = vxpose.xlu0.b32.cont [11/16] 0.0, 128
    %199 = vxpose.xlu0.b32.cont [12/16] 0.0, 128
    %200 = vxpose.xlu0.b32.cont [13/16] 0.0, 128
    %201 = vxpose.xlu0.b32.cont [14/16] 0.0, 128
    %202 = vxpose.xlu0.b32.cont [15/16] 0.0, 128
    %203 = vxpose.xlu0.b32.end [16/16] 0.0, 128
    %v204 = vpop.trf.xlu0
    %v205 = vpop.trf.xlu0
    %v206 = vpop.trf.xlu0
    %v207 = vpop.trf.xlu0
    %v208 = vpop.trf.xlu0
    %v209 = vpop.trf.xlu0
    %v210 = vpop.trf.xlu0
    %v211 = vpop.trf.xlu0
    %v212 = vpop.trf.xlu0
    %v213 = vpop.trf.xlu0
    %v214 = vpop.trf.xlu0
    %v215 = vpop.trf.xlu0
    %v216 = vpop.trf.xlu0
    %v217 = vpop.trf.xlu0
    %v218 = vpop.trf.xlu0
    %v219 = vpop.trf.xlu0
    %220 = vxpose.xlu0.b32.start [1/16] %v187, 128
    %221 = vxpose.xlu0.b32.cont [2/16] 0.0, 128
    %222 = vxpose.xlu0.b32.cont [3/16] 0.0, 128
    %223 = vxpose.xlu0.b32.cont [4/16] 0.0, 128
    %224 = vxpose.xlu0.b32.cont [5/16] 0.0, 128
    %225 = vxpose.xlu0.b32.cont [6/16] 0.0, 128
    %226 = vxpose.xlu0.b32.cont [7/16] 0.0, 128
    %227 = vxpose.xlu0.b32.cont [8/16] 0.0, 128
    %228 = vxpose.xlu0.b32.cont [9/16] 0.0, 128
    %229 = vxpose.xlu0.b32.cont [10/16] 0.0, 128
    %230 = vxpose.xlu0.b32.cont [11/16] 0.0, 128
    %231 = vxpose.xlu0.b32.cont [12/16] 0.0, 128
    %232 = vxpose.xlu0.b32.cont [13/16] 0.0, 128
    %233 = vxpose.xlu0.b32.cont [14/16] 0.0, 128
    %234 = vxpose.xlu0.b32.cont [15/16] 0.0, 128
    %235 = vxpose.xlu0.b32.end [16/16] 0.0, 128
    %v236 = vpop.trf.xlu0
    %v237 = vpop.trf.xlu0
    %v238 = vpop.trf.xlu0
    %v239 = vpop.trf.xlu0
    %v240 = vpop.trf.xlu0
    %v241 = vpop.trf.xlu0
    %v242 = vpop.trf.xlu0
    %v243 = vpop.trf.xlu0
    %v244 = vpop.trf.xlu0
    %v245 = vpop.trf.xlu0
    %v246 = vpop.trf.xlu0
    %v247 = vpop.trf.xlu0
    %v248 = vpop.trf.xlu0
    %v249 = vpop.trf.xlu0
    %v250 = vpop.trf.xlu0
    %v251 = vpop.trf.xlu0
    %v252 = vpack.c.bf16 %v205, %v204
    %v253 = vpack.c.bf16 %v207, %v206
    %v254 = vpack.c.bf16 %v237, %v236
    %v255 = vpack.c.bf16 %v239, %v238
    %v256 = vlaneseq
    %v257 = vshrl.u32 %v256, 7
    %v258 = vsub.s32 0, %v257
    %v259 = vrot.slane %v122, %v258
    %vm260 = vcmask 64512
    %v262 = vsel %vm260, %v252, 0
    %v265 = vsel %vm260, %v253, 0
    %v268 = vsel %vm260, %v254, 0
    %v271 = vsel %vm260, %v255, 0
    %vm273 = vcmask 1043456
    %v275 = vsel %vm273, %v124, 0
    %277 = vmatprep.subr.bf16.mxu0 0
    %278 = vmatpush1.bf16.msra.mxu0 %v275
    %279 = vmatprep.subr.bf16.mxu0 0
    %280 = vmatpush1.bf16.msra.mxu0 0
    %281 = vmatprep.subr.bf16.mxu0 0
    %282 = vmatpush1.bf16.msra.mxu0 0
    %283 = vmatprep.subr.bf16.mxu0 0
    %284 = vmatpush1.bf16.msra.mxu0 0
    %285 = vmatprep.subr.bf16.mxu0 0
    %286 = vmatpush1.bf16.msra.mxu0 0
    %287 = vmatprep.subr.bf16.mxu0 0
    %288 = vmatpush1.bf16.msra.mxu0 0
    %289 = vmatprep.subr.bf16.mxu0 0
    %290 = vmatpush1.bf16.msra.mxu0 0
    %291 = vmatprep.subr.bf16.mxu0 0
    %292 = vmatpush1.bf16.msra.mxu0 0
    %293 = vmatprep.subr.bf16.mxu0 0
    %294 = vmatpush1.bf16.msra.mxu0 0
    %295 = vmatprep.subr.bf16.mxu0 0
    %296 = vmatpush1.bf16.msra.mxu0 0
    %297 = vmatprep.subr.bf16.mxu0 0
    %298 = vmatpush1.bf16.msra.mxu0 0
    %299 = vmatprep.subr.bf16.mxu0 0
    %300 = vmatpush1.bf16.msra.mxu0 0
    %301 = vmatprep.subr.bf16.mxu0 0
    %302 = vmatpush1.bf16.msra.mxu0 0
    %303 = vmatprep.subr.bf16.mxu0 0
    %304 = vmatpush1.bf16.msra.mxu0 0
    %305 = vmatprep.subr.bf16.mxu0 0
    %306 = vmatpush1.bf16.msra.mxu0 0
    %307 = vmatprep.subr.bf16.mxu0 0
    %308 = vmatpush1.bf16.msra.mxu0 0
    %309 = vmatprep.mubr.bf16.mxu0 0
    %310 = vmatmul.mubr.bf16.gmra.mrb[0].mxu0 %v262
    %v311 = vpop.f32.mrb[0].mxu0
    %v312 = vadd.f32 %v259, %v311
    %v313 = vpop.f32.mrb[0].mxu0
    %v314 = vpop.f32.mrb[0].mxu0
    %v315 = vadd.f32 %v259, %v314
    %v316 = vpop.f32.mrb[0].mxu0
    %317 = vmatprep.mubr.bf16.mxu0 0
    %318 = vmatmul.mubr.bf16.gmra.mrb[0].mxu0 %v265
    %v319 = vpop.f32.mrb[0].mxu0
    %v320 = vadd.f32 %v259, %v319
    %v321 = vpop.f32.mrb[0].mxu0
    %v322 = vpop.f32.mrb[0].mxu0
    %v323 = vadd.f32 %v259, %v322
    %v324 = vpop.f32.mrb[0].mxu0
    %325 = vmatprep.mubr.bf16.mxu0 0
    %326 = vmatmul.mubr.bf16.gmra.mrb[0].mxu0 %v268
    %v327 = vpop.f32.mrb[0].mxu0
    %v328 = vadd.f32 %v259, %v327
    %v329 = vpop.f32.mrb[0].mxu0
    %v330 = vpop.f32.mrb[0].mxu0
    %v331 = vadd.f32 %v259, %v330
    %v332 = vpop.f32.mrb[0].mxu0
    %333 = vmatprep.mubr.bf16.mxu0 0
    %334 = vmatmul.mubr.bf16.gmra.mrb[0].mxu0 %v271
    %v335 = vpop.f32.mrb[0].mxu0
    %v336 = vadd.f32 %v259, %v335
    %v337 = vpop.f32.mrb[0].mxu0
    %v338 = vpop.f32.mrb[0].mxu0
    %v339 = vadd.f32 %v259, %v338
    %v340 = vpop.f32.mrb[0].mxu0
    %341 = vdwg.mxu0
    %v342 = vmul.f32 %v312, 0.5
    %v343 = vmul.f32 %v315, 0.5
    %v344 = vmul.f32 %v320, 0.5
    %v345 = vmul.f32 %v323, 0.5
    %v346 = vmul.f32 %v328, 0.5
    %v347 = vmul.f32 %v331, 0.5
    %v348 = vmul.f32 %v336, 0.5
    %v349 = vmul.f32 %v339, 0.5
    %v350 = vmul.f32 %v312, 0.044715
    %v351 = vmul.f32 %v315, 0.044715
    %v352 = vmul.f32 %v320, 0.044715
    %v353 = vmul.f32 %v323, 0.044715
    %v354 = vmul.f32 %v328, 0.044715
    %v355 = vmul.f32 %v331, 0.044715
    %v356 = vmul.f32 %v336, 0.044715
    %v357 = vmul.f32 %v339, 0.044715
    %v358 = vmul.f32 %v350, %v312
    %v359 = vmul.f32 %v351, %v315
    %v360 = vmul.f32 %v352, %v320
    %v361 = vmul.f32 %v353, %v323
    %v362 = vmul.f32 %v354, %v328
    %v363 = vmul.f32 %v355, %v331
    %v364 = vmul.f32 %v356, %v336
    %v365 = vmul.f32 %v357, %v339
    %v366 = vmul.f32 %v358, %v312
    %v367 = vmul.f32 %v359, %v315
    %v368 = vmul.f32 %v360, %v320
    %v369 = vmul.f32 %v361, %v323
    %v370 = vmul.f32 %v362, %v328
    %v371 = vmul.f32 %v363, %v331
    %v372 = vmul.f32 %v364, %v336
    %v373 = vmul.f32 %v365, %v339
    %v374 = vadd.f32 %v312, %v366
    %v375 = vadd.f32 %v315, %v367
    %v376 = vadd.f32 %v320, %v368
    %v377 = vadd.f32 %v323, %v369
    %v378 = vadd.f32 %v328, %v370
    %v379 = vadd.f32 %v331, %v371
    %v380 = vadd.f32 %v336, %v372
    %v381 = vadd.f32 %v339, %v373
    %v382 = vmul.f32 %v374, 0.7978846
    %v383 = vmul.f32 %v375, 0.7978846
    %v384 = vmul.f32 %v376, 0.7978846
    %v385 = vmul.f32 %v377, 0.7978846
    %v386 = vmul.f32 %v378, 0.7978846
    %v387 = vmul.f32 %v379, 0.7978846
    %v388 = vmul.f32 %v380, 0.7978846
    %v389 = vmul.f32 %v381, 0.7978846
    %v390 = vtanh.pop %v382
    %v391 = vtanh.pop %v383
    %v392 = vtanh.pop %v384
    %v393 = vtanh.pop %v385
    %v394 = vtanh.pop %v386
    %v395 = vtanh.pop %v387
    %v396 = vtanh.pop %v388
    %v397 = vtanh.pop %v389
    %v398 = vadd.f32 %v390, 1.0
    %v399 = vadd.f32 %v391, 1.0
    %v400 = vadd.f32 %v392, 1.0
    %v401 = vadd.f32 %v393, 1.0
    %v402 = vadd.f32 %v394, 1.0
    %v403 = vadd.f32 %v395, 1.0
    %v404 = vadd.f32 %v396, 1.0
    %v405 = vadd.f32 %v397, 1.0
    %v406 = vmul.f32 %v342, %v398
    %v407 = vmul.f32 %v343, %v399
    %v408 = vmul.f32 %v344, %v400
    %v409 = vmul.f32 %v345, %v401
    %v410 = vmul.f32 %v346, %v402
    %v411 = vmul.f32 %v347, %v403
    %v412 = vmul.f32 %v348, %v404
    %v413 = vmul.f32 %v349, %v405
    %v414 = vpack.c.bf16 %v407, %v406
    %v415 = vpack.c.bf16 %v409, %v408
    %v416 = vpack.c.bf16 %v411, %v410
    %v417 = vpack.c.bf16 %v413, %v412
    %v418 = vlaneseq
    %v419 = vshrl.u32 %v418, 7
    %v420 = vsub.s32 1, %v419
    %v421 = vrot.slane %v122, %v420
    %v426 = vunpack.c.l.b16 %v125
    %v427 = vunpack.c.l.b16 %v126
    %v428 = vunpack.c.l.b16 %v127
    %v429 = vunpack.c.l.b16 %v128
    %v430 = vpack.c.b16 %v427, %v426
    %v431 = vpack.c.b16 %v429, %v428
    %v435 = vsel %vm76, %v414, 0
    %v438 = vsel %vm76, %v415, 0
    %v441 = vsel %vm76, %v416, 0
    %v444 = vsel %vm76, %v417, 0
    %446 = vmatprep.subr.bf16.mxu0 0
    %447 = vmatpush1.bf16.msra.mxu0 %v430
    %448 = vmatprep.subr.bf16.mxu0 0
    %449 = vmatpush1.bf16.msra.mxu0 %v431
    %450 = vmatprep.subr.bf16.mxu0 0
    %451 = vmatpush1.bf16.msra.mxu0 0
    %452 = vmatprep.subr.bf16.mxu0 0
    %453 = vmatpush1.bf16.msra.mxu0 0
    %454 = vmatprep.subr.bf16.mxu0 0
    %455 = vmatpush1.bf16.msra.mxu0 0
    %456 = vmatprep.subr.bf16.mxu0 0
    %457 = vmatpush1.bf16.msra.mxu0 0
    %458 = vmatprep.subr.bf16.mxu0 0
    %459 = vmatpush1.bf16.msra.mxu0 0
    %460 = vmatprep.subr.bf16.mxu0 0
    %461 = vmatpush1.bf16.msra.mxu0 0
    %462 = vmatprep.subr.bf16.mxu0 0
    %463 = vmatpush1.bf16.msra.mxu0 0
    %464 = vmatprep.subr.bf16.mxu0 0
    %465 = vmatpush1.bf16.msra.mxu0 0
    %466 = vmatprep.subr.bf16.mxu0 0
    %467 = vmatpush1.bf16.msra.mxu0 0
    %468 = vmatprep.subr.bf16.mxu0 0
    %469 = vmatpush1.bf16.msra.mxu0 0
    %470 = vmatprep.subr.bf16.mxu0 0
    %471 = vmatpush1.bf16.msra.mxu0 0
    %472 = vmatprep.subr.bf16.mxu0 0
    %473 = vmatpush1.bf16.msra.mxu0 0
    %474 = vmatprep.subr.bf16.mxu0 0
    %475 = vmatpush1.bf16.msra.mxu0 0
    %476 = vmatprep.subr.bf16.mxu0 0
    %477 = vmatpush1.bf16.msra.mxu0 0
    %478 = vmatprep.mubr.bf16.mxu0 0
    %479 = vmatmul.mubr.bf16.gmra.mrb[0].mxu0 %v435
    %v480 = vpop.f32.mrb[0].mxu0
    %v481 = vadd.f32 %v421, %v480
    %v482 = vpop.f32.mrb[0].mxu0
    %v483 = vpop.f32.mrb[0].mxu0
    %v484 = vadd.f32 %v421, %v483
    %v485 = vpop.f32.mrb[0].mxu0
    %486 = vmatprep.mubr.bf16.mxu0 0
    %487 = vmatmul.mubr.bf16.gmra.mrb[0].mxu0 %v438
    %v488 = vpop.f32.mrb[0].mxu0
    %v489 = vadd.f32 %v421, %v488
    %v490 = vpop.f32.mrb[0].mxu0
    %v491 = vpop.f32.mrb[0].mxu0
    %v492 = vadd.f32 %v421, %v491
    %v493 = vpop.f32.mrb[0].mxu0
    %494 = vmatprep.mubr.bf16.mxu0 0
    %495 = vmatmul.mubr.bf16.gmra.mrb[0].mxu0 %v441
    %v496 = vpop.f32.mrb[0].mxu0
    %v497 = vadd.f32 %v421, %v496
    %v498 = vpop.f32.mrb[0].mxu0
    %v499 = vpop.f32.mrb[0].mxu0
    %v500 = vadd.f32 %v421, %v499
    %v501 = vpop.f32.mrb[0].mxu0
    %502 = vmatprep.mubr.bf16.mxu0 0
    %503 = vmatmul.mubr.bf16.gmra.mrb[0].mxu0 %v444
    %v504 = vpop.f32.mrb[0].mxu0
    %v505 = vadd.f32 %v421, %v504
    %v506 = vpop.f32.mrb[0].mxu0
    %v507 = vpop.f32.mrb[0].mxu0
    %v508 = vadd.f32 %v421, %v507
    %v509 = vpop.f32.mrb[0].mxu0
    %510 = vdwg.mxu0
    %511 = vxpose.xlu0.b32.start [1/16] %v481, 128
    %512 = vxpose.xlu0.b32.cont [2/16] %v484, 128
    %513 = vxpose.xlu0.b32.cont [3/16] %v489, 128
    %514 = vxpose.xlu0.b32.cont [4/16] %v492, 128
    %515 = vxpose.xlu0.b32.cont [5/16] 0.0, 128
    %516 = vxpose.xlu0.b32.cont [6/16] 0.0, 128
    %517 = vxpose.xlu0.b32.cont [7/16] 0.0, 128
    %518 = vxpose.xlu0.b32.cont [8/16] 0.0, 128
    %519 = vxpose.xlu0.b32.cont [9/16] 0.0, 128
    %520 = vxpose.xlu0.b32.cont [10/16] 0.0, 128
    %521 = vxpose.xlu0.b32.cont [11/16] 0.0, 128
    %522 = vxpose.xlu0.b32.cont [12/16] 0.0, 128
    %523 = vxpose.xlu0.b32.cont [13/16] 0.0, 128
    %524 = vxpose.xlu0.b32.cont [14/16] 0.0, 128
    %525 = vxpose.xlu0.b32.cont [15/16] 0.0, 128
    %526 = vxpose.xlu0.b32.end [16/16] 0.0, 128
    %v527 = vpop.trf.xlu0
    %v528 = vpop.trf.xlu0
    %v529 = vpop.trf.xlu0
    %v530 = vpop.trf.xlu0
    %v531 = vpop.trf.xlu0
    %v532 = vpop.trf.xlu0
    %v533 = vpop.trf.xlu0
    %v534 = vpop.trf.xlu0
    %v535 = vpop.trf.xlu0
    %v536 = vpop.trf.xlu0
    %v537 = vpop.trf.xlu0
    %v538 = vpop.trf.xlu0
    %v539 = vpop.trf.xlu0
    %v540 = vpop.trf.xlu0
    %v541 = vpop.trf.xlu0
    %v542 = vpop.trf.xlu0
    %543 = vxpose.xlu0.b32.start [1/16] %v497, 128
    %544 = vxpose.xlu0.b32.cont [2/16] %v500, 128
    %545 = vxpose.xlu0.b32.cont [3/16] %v505, 128
    %546 = vxpose.xlu0.b32.cont [4/16] %v508, 128
    %547 = vxpose.xlu0.b32.cont [5/16] 0.0, 128
    %548 = vxpose.xlu0.b32.cont [6/16] 0.0, 128
    %549 = vxpose.xlu0.b32.cont [7/16] 0.0, 128
    %550 = vxpose.xlu0.b32.cont [8/16] 0.0, 128
    %551 = vxpose.xlu0.b32.cont [9/16] 0.0, 128
    %552 = vxpose.xlu0.b32.cont [10/16] 0.0, 128
    %553 = vxpose.xlu0.b32.cont [11/16] 0.0, 128
    %554 = vxpose.xlu0.b32.cont [12/16] 0.0, 128
    %555 = vxpose.xlu0.b32.cont [13/16] 0.0, 128
    %556 = vxpose.xlu0.b32.cont [14/16] 0.0, 128
    %557 = vxpose.xlu0.b32.cont [15/16] 0.0, 128
    %558 = vxpose.xlu0.b32.end [16/16] 0.0, 128
    %v559 = vpop.trf.xlu0
    %v560 = vpop.trf.xlu0
    %v561 = vpop.trf.xlu0
    %v562 = vpop.trf.xlu0
    %v563 = vpop.trf.xlu0
    %v564 = vpop.trf.xlu0
    %v565 = vpop.trf.xlu0
    %v566 = vpop.trf.xlu0
    %v567 = vpop.trf.xlu0
    %v568 = vpop.trf.xlu0
    %v569 = vpop.trf.xlu0
    %v570 = vpop.trf.xlu0
    %v571 = vpop.trf.xlu0
    %v572 = vpop.trf.xlu0
    %v573 = vpop.trf.xlu0
    %v574 = vpop.trf.xlu0
    %v575 = vadd.f32 %v115, %v527
    %v576 = vadd.f32 %v118, %v559
    %v577 = vsel %vm76, %v575, 0.0
    %578 = vadd.xlane.f32.xlu0 %v577
    %v579 = vpop.xlane.xlu0 %578
    %v580 = vsel %vm76, %v576, 0.0
    %581 = vadd.xlane.f32.xlu0 %v580
    %v582 = vpop.xlane.xlu0 %581
    %v583 = vmul.f32 %v579, %v155
    %v584 = vmul.f32 %v582, %v155
    %v585 = vsub.f32 %v575, %v583
    %v586 = vsub.f32 %v576, %v584
    %v587 = vmul.f32 %v585, %v585
    %v588 = vmul.f32 %v586, %v586
    %v589 = vsel %vm76, %v587, 0.0
    %590 = vadd.xlane.f32.xlu0 %v589
    %v591 = vpop.xlane.xlu0 %590
    %v592 = vsel %vm76, %v588, 0.0
    %593 = vadd.xlane.f32.xlu0 %v592
    %v594 = vpop.xlane.xlu0 %593
    %v595 = vmul.f32 %v591, %v155
    %v596 = vmul.f32 %v594, %v155
    %v597 = vadd.f32 %v595, 1e-05
    %v598 = vadd.f32 %v596, 1e-05
    %v599 = vrsqrt.pop %v597
    %v600 = vrsqrt.pop %v598
    %v601 = vmul.f32 %v585, %v599
    %v602 = vmul.f32 %v586, %v600
    %v603 = vlaneseq
    %v604 = vshrl.u32 %v603, 7
    %v605 = vsub.s32 2, %v604
    %v606 = vrot.slane %v121, %v605
    %v607 = vmul.f32 %v601, %v606
    %v608 = vmul.f32 %v602, %v606
    %v609 = vlaneseq
    %v610 = vshrl.u32 %v609, 7
    %v611 = vsub.s32 3, %v610
    %v612 = vrot.slane %v121, %v611
    %v613 = vadd.f32 %v607, %v612
    %v614 = vadd.f32 %v608, %v612
    %v615 = vpack.c.bf16 %v614, %v613
    %v617 = vlaneseq
    %v618 = vshrl.u32 %v617, 7
    %v619 = vsub.s32 0, %v618
    %v620 = vrot.slane %v123, %v619
    %v626 = vunpack.c.l.b16 %v129
    %v627 = vunpack.c.l.b16 %v130
    %v628 = vunpack.c.l.b16 %v131
    %v629 = vunpack.c.l.b16 %v132
    %v630 = vpack.c.b16 %v627, %v626
    %v631 = vpack.c.b16 %v629, %v628
    %v635 = vsel %vm76, %v615, 0
    %637 = vmatprep.subr.bf16.mxu0 0
    %638 = vmatpush1.bf16.msra.mxu0 %v630
    %639 = vmatprep.subr.bf16.mxu0 0
    %640 = vmatpush1.bf16.msra.mxu0 %v631
    %641 = vmatprep.subr.bf16.mxu0 0
    %642 = vmatpush1.bf16.msra.mxu0 0
    %643 = vmatprep.subr.bf16.mxu0 0
    %644 = vmatpush1.bf16.msra.mxu0 0
    %645 = vmatprep.subr.bf16.mxu0 0
    %646 = vmatpush1.bf16.msra.mxu0 0
    %647 = vmatprep.subr.bf16.mxu0 0
    %648 = vmatpush1.bf16.msra.mxu0 0
    %649 = vmatprep.subr.bf16.mxu0 0
    %650 = vmatpush1.bf16.msra.mxu0 0
    %651 = vmatprep.subr.bf16.mxu0 0
    %652 = vmatpush1.bf16.msra.mxu0 0
    %653 = vmatprep.subr.bf16.mxu0 0
    %654 = vmatpush1.bf16.msra.mxu0 0
    %655 = vmatprep.subr.bf16.mxu0 0
    %656 = vmatpush1.bf16.msra.mxu0 0
    %657 = vmatprep.subr.bf16.mxu0 0
    %658 = vmatpush1.bf16.msra.mxu0 0
    %659 = vmatprep.subr.bf16.mxu0 0
    %660 = vmatpush1.bf16.msra.mxu0 0
    %661 = vmatprep.subr.bf16.mxu0 0
    %662 = vmatpush1.bf16.msra.mxu0 0
    %663 = vmatprep.subr.bf16.mxu0 0
    %664 = vmatpush1.bf16.msra.mxu0 0
    %665 = vmatprep.subr.bf16.mxu0 0
    %666 = vmatpush1.bf16.msra.mxu0 0
    %667 = vmatprep.subr.bf16.mxu0 0
    %668 = vmatpush1.bf16.msra.mxu0 0
    %669 = vmatprep.mubr.bf16.mxu0 0
    %670 = vmatmul.mubr.bf16.gmra.mrb[0].mxu0 %v635
    %v671 = vpop.f32.mrb[0].mxu0
    %v672 = vadd.f32 %v620, %v671
    %v673 = vpop.f32.mrb[0].mxu0
    %v674 = vpop.f32.mrb[0].mxu0
    %v675 = vadd.f32 %v620, %v674
    %v676 = vpop.f32.mrb[0].mxu0
    %677 = vdwg.mxu0
    %v678 = vmul.f32 %v672, 0.5
    %v679 = vmul.f32 %v675, 0.5
    %v680 = vmul.f32 %v672, 0.044715
    %v681 = vmul.f32 %v675, 0.044715
    %v682 = vmul.f32 %v680, %v672
    %v683 = vmul.f32 %v681, %v675
    %v684 = vmul.f32 %v682, %v672
    %v685 = vmul.f32 %v683, %v675
    %v686 = vadd.f32 %v672, %v684
    %v687 = vadd.f32 %v675, %v685
    %v688 = vmul.f32 %v686, 0.7978846
    %v689 = vmul.f32 %v687, 0.7978846
    %v690 = vtanh.pop %v688
    %v691 = vtanh.pop %v689
    %v692 = vadd.f32 %v690, 1.0
    %v693 = vadd.f32 %v691, 1.0
    %v694 = vmul.f32 %v678, %v692
    %v695 = vmul.f32 %v679, %v693
    %v696 = vpack.c.bf16 %v695, %v694
    %v697 = vlaneseq
    %v698 = vshrl.u32 %v697, 7
    %v699 = vsub.s32 4, %v698
    %v700 = vrot.slane %v121, %v699
    %v717 = vunpack.c.l.b16 %v133
    %v718 = vunpack.c.l.b16 %v134
    %v719 = vunpack.c.l.b16 %v135
    %v720 = vunpack.c.l.b16 %v136
    %v721 = vunpack.c.l.b16 %v137
    %v722 = vunpack.c.l.b16 %v138
    %v723 = vunpack.c.l.b16 %v139
    %v724 = vunpack.c.l.b16 %v140
    %v725 = vunpack.c.l.b16 %v141
    %v726 = vunpack.c.l.b16 %v142
    %v727 = vunpack.c.l.b16 %v143
    %v728 = vunpack.c.l.b16 %v144
    %v729 = vunpack.c.l.b16 %v145
    %v730 = vunpack.c.l.b16 %v146
    %v731 = vunpack.c.l.b16 %v147
    %v732 = vunpack.c.l.b16 %v148
    %v733 = vpack.c.b16 %v718, %v717
    %v734 = vpack.c.b16 %v720, %v719
    %v735 = vpack.c.b16 %v722, %v721
    %v736 = vpack.c.b16 %v724, %v723
    %v737 = vpack.c.b16 %v726, %v725
    %v738 = vpack.c.b16 %v728, %v727
    %v739 = vpack.c.b16 %v730, %v729
    %v740 = vpack.c.b16 %v732, %v731
    %749 = vmatprep.subr.bf16.mxu0 0
    %750 = vmatpush1.bf16.msra.mxu0 %v733
    %751 = vmatprep.subr.bf16.mxu0 0
    %752 = vmatpush1.bf16.msra.mxu0 %v734
    %753 = vmatprep.subr.bf16.mxu0 0
    %754 = vmatpush1.bf16.msra.mxu0 %v735
    %755 = vmatprep.subr.bf16.mxu0 0
    %756 = vmatpush1.bf16.msra.mxu0 %v736
    %757 = vmatprep.subr.bf16.mxu0 0
    %758 = vmatpush1.bf16.msra.mxu0 %v737
    %759 = vmatprep.subr.bf16.mxu0 0
    %760 = vmatpush1.bf16.msra.mxu0 %v738
    %761 = vmatprep.subr.bf16.mxu0 0
    %762 = vmatpush1.bf16.msra.mxu0 %v739
    %763 = vmatprep.subr.bf16.mxu0 0
    %764 = vmatpush1.bf16.msra.mxu0 %v740
    %765 = vmatprep.subr.bf16.mxu0 0
    %766 = vmatpush1.bf16.msra.mxu0 0
    %767 = vmatprep.subr.bf16.mxu0 0
    %768 = vmatpush1.bf16.msra.mxu0 0
    %769 = vmatprep.subr.bf16.mxu0 0
    %770 = vmatpush1.bf16.msra.mxu0 0
    %771 = vmatprep.subr.bf16.mxu0 0
    %772 = vmatpush1.bf16.msra.mxu0 0
    %773 = vmatprep.subr.bf16.mxu0 0
    %774 = vmatpush1.bf16.msra.mxu0 0
    %775 = vmatprep.subr.bf16.mxu0 0
    %776 = vmatpush1.bf16.msra.mxu0 0
    %777 = vmatprep.subr.bf16.mxu0 0
    %778 = vmatpush1.bf16.msra.mxu0 0
    %779 = vmatprep.subr.bf16.mxu0 0
    %780 = vmatpush1.bf16.msra.mxu0 0
    %781 = vmatprep.mubr.bf16.mxu0 0
    %782 = vmatmul.mubr.bf16.gmra.mrb[0].mxu0 %v696
    %v783 = vpop.f32.mrb[0].mxu0
    %v784 = vadd.f32 %v700, %v783
    %v785 = vpop.f32.mrb[0].mxu0
    %v786 = vpop.f32.mrb[0].mxu0
    %v787 = vadd.f32 %v700, %v786
    %v788 = vpop.f32.mrb[0].mxu0
    %789 = vdwg.mxu0
    %v790 = vadd.f32 %v575, %v784
    %v791 = vadd.f32 %v576, %v787
    %s792 = scalar_lea.vmem %s6, 8
    %v793 = vld [vmem:[%s792] sm:$0x1f]
    %s794 = scalar_lea.vmem %s7, 2
    %v795 = vld [vmem:[%s794] sm:$0x3]
    %s796 = scalar_lea.vmem %s8, 1
    %v797 = vld [vmem:[%s796] sm:$0x1]
    %s798 = scalar_lea.vmem %s9, 4
    %v799 = vld [vmem:[%s798] sm:$0xf]
    %s800 = scalar_lea.vmem %s10, 16
    %v801 = vld [vmem:[%s800] sm:$0xf]
    %v802 = vld [vmem:[%s800 + $0x4] sm:$0xf]
    %v803 = vld [vmem:[%s800 + $0x8] sm:$0xf]
    %v804 = vld [vmem:[%s800 + $0xc] sm:$0xf]
    %s805 = scalar_lea.vmem %s11, 16
    %v806 = vld [vmem:[%s805] sm:$0xf]
    %v807 = vld [vmem:[%s805 + $0x4] sm:$0xf]
    %v808 = vld [vmem:[%s805 + $0x8] sm:$0xf]
    %v809 = vld [vmem:[%s805 + $0xc] sm:$0xf]
    %s810 = scalar_lea.vmem %s12, 64
    %v811 = vld [vmem:[%s810] sm:$0xf]
    %v812 = vld [vmem:[%s810 + $0x4] sm:$0xf]
    %v813 = vld [vmem:[%s810 + $0x8] sm:$0xf]
    %v814 = vld [vmem:[%s810 + $0xc] sm:$0xf]
    %v815 = vld [vmem:[%s810 + $0x10] sm:$0xf]
    %v816 = vld [vmem:[%s810 + $0x14] sm:$0xf]
    %v817 = vld [vmem:[%s810 + $0x18] sm:$0xf]
    %v818 = vld [vmem:[%s810 + $0x1c] sm:$0xf]
    %v819 = vld [vmem:[%s810 + $0x20] sm:$0xf]
    %v820 = vld [vmem:[%s810 + $0x24] sm:$0xf]
    %v821 = vld [vmem:[%s810 + $0x28] sm:$0xf]
    %v822 = vld [vmem:[%s810 + $0x2c] sm:$0xf]
    %v823 = vld [vmem:[%s810 + $0x30] sm:$0xf]
    %v824 = vld [vmem:[%s810 + $0x34] sm:$0xf]
    %v825 = vld [vmem:[%s810 + $0x38] sm:$0xf]
    %v826 = vld [vmem:[%s810 + $0x3c] sm:$0xf]
    %v827 = vsel %vm76, %v790, 0.0
    %828 = vadd.xlane.f32.xlu0 %v827
    %v829 = vpop.xlane.xlu0 %828
    %v830 = vsel %vm76, %v791, 0.0
    %831 = vadd.xlane.f32.xlu0 %v830
    %v832 = vpop.xlane.xlu0 %831
    %v833 = vmul.f32 %v829, %v155
    %v834 = vmul.f32 %v832, %v155
    %v835 = vsub.f32 %v790, %v833
    %v836 = vsub.f32 %v791, %v834
    %v837 = vmul.f32 %v835, %v835
    %v838 = vmul.f32 %v836, %v836
    %v839 = vsel %vm76, %v837, 0.0
    %840 = vadd.xlane.f32.xlu0 %v839
    %v841 = vpop.xlane.xlu0 %840
    %v842 = vsel %vm76, %v838, 0.0
    %843 = vadd.xlane.f32.xlu0 %v842
    %v844 = vpop.xlane.xlu0 %843
    %v845 = vmul.f32 %v841, %v155
    %v846 = vmul.f32 %v844, %v155
    %v847 = vadd.f32 %v845, 1e-05
    %v848 = vadd.f32 %v846, 1e-05
    %v849 = vrsqrt.pop %v847
    %v850 = vrsqrt.pop %v848
    %v851 = vmul.f32 %v835, %v849
    %v852 = vmul.f32 %v836, %v850
    %v853 = vlaneseq
    %v854 = vshrl.u32 %v853, 7
    %v855 = vsub.s32 0, %v854
    %v856 = vrot.slane %v793, %v855
    %v857 = vmul.f32 %v851, %v856
    %v858 = vmul.f32 %v852, %v856
    %v859 = vlaneseq
    %v860 = vshrl.u32 %v859, 7
    %v861 = vsub.s32 1, %v860
    %v862 = vrot.slane %v793, %v861
    %v863 = vadd.f32 %v857, %v862
    %v864 = vadd.f32 %v858, %v862
    %865 = vxpose.xlu0.b32.start [1/16] %v863, 128
    %866 = vxpose.xlu0.b32.cont [2/16] 0.0, 128
    %867 = vxpose.xlu0.b32.cont [3/16] 0.0, 128
    %868 = vxpose.xlu0.b32.cont [4/16] 0.0, 128
    %869 = vxpose.xlu0.b32.cont [5/16] 0.0, 128
    %870 = vxpose.xlu0.b32.cont [6/16] 0.0, 128
    %871 = vxpose.xlu0.b32.cont [7/16] 0.0, 128
    %872 = vxpose.xlu0.b32.cont [8/16] 0.0, 128
    %873 = vxpose.xlu0.b32.cont [9/16] 0.0, 128
    %874 = vxpose.xlu0.b32.cont [10/16] 0.0, 128
    %875 = vxpose.xlu0.b32.cont [11/16] 0.0, 128
    %876 = vxpose.xlu0.b32.cont [12/16] 0.0, 128
    %877 = vxpose.xlu0.b32.cont [13/16] 0.0, 128
    %878 = vxpose.xlu0.b32.cont [14/16] 0.0, 128
    %879 = vxpose.xlu0.b32.cont [15/16] 0.0, 128
    %880 = vxpose.xlu0.b32.end [16/16] 0.0, 128
    %v881 = vpop.trf.xlu0
    %v882 = vpop.trf.xlu0
    %v883 = vpop.trf.xlu0
    %v884 = vpop.trf.xlu0
    %v885 = vpop.trf.xlu0
    %v886 = vpop.trf.xlu0
    %v887 = vpop.trf.xlu0
    %v888 = vpop.trf.xlu0
    %v889 = vpop.trf.xlu0
    %v890 = vpop.trf.xlu0
    %v891 = vpop.trf.xlu0
    %v892 = vpop.trf.xlu0
    %v893 = vpop.trf.xlu0
    %v894 = vpop.trf.xlu0
    %v895 = vpop.trf.xlu0
    %v896 = vpop.trf.xlu0
    %897 = vxpose.xlu0.b32.start [1/16] %v864, 128
    %898 = vxpose.xlu0.b32.cont [2/16] 0.0, 128
    %899 = vxpose.xlu0.b32.cont [3/16] 0.0, 128
    %900 = vxpose.xlu0.b32.cont [4/16] 0.0, 128
    %901 = vxpose.xlu0.b32.cont [5/16] 0.0, 128
    %902 = vxpose.xlu0.b32.cont [6/16] 0.0, 128
    %903 = vxpose.xlu0.b32.cont [7/16] 0.0, 128
    %904 = vxpose.xlu0.b32.cont [8/16] 0.0, 128
    %905 = vxpose.xlu0.b32.cont [9/16] 0.0, 128
    %906 = vxpose.xlu0.b32.cont [10/16] 0.0, 128
    %907 = vxpose.xlu0.b32.cont [11/16] 0.0, 128
    %908 = vxpose.xlu0.b32.cont [12/16] 0.0, 128
    %909 = vxpose.xlu0.b32.cont [13/16] 0.0, 128
    %910 = vxpose.xlu0.b32.cont [14/16] 0.0, 128
    %911 = vxpose.xlu0.b32.cont [15/16] 0.0, 128
    %912 = vxpose.xlu0.b32.end [16/16] 0.0, 128
    %v913 = vpop.trf.xlu0
    %v914 = vpop.trf.xlu0
    %v915 = vpop.trf.xlu0
    %v916 = vpop.trf.xlu0
    %v917 = vpop.trf.xlu0
    %v918 = vpop.trf.xlu0
    %v919 = vpop.trf.xlu0
    %v920 = vpop.trf.xlu0
    %v921 = vpop.trf.xlu0
    %v922 = vpop.trf.xlu0
    %v923 = vpop.trf.xlu0
    %v924 = vpop.trf.xlu0
    %v925 = vpop.trf.xlu0
    %v926 = vpop.trf.xlu0
    %v927 = vpop.trf.xlu0
    %v928 = vpop.trf.xlu0
    %v929 = vpack.c.bf16 %v882, %v881
    %v930 = vpack.c.bf16 %v884, %v883
    %v931 = vpack.c.bf16 %v914, %v913
    %v932 = vpack.c.bf16 %v916, %v915
    %v933 = vlaneseq
    %v934 = vshrl.u32 %v933, 7
    %v935 = vsub.s32 0, %v934
    %v936 = vrot.slane %v795, %v935
    %v938 = vsel %vm260, %v929, 0
    %v941 = vsel %vm260, %v930, 0
    %v944 = vsel %vm260, %v931, 0
    %v947 = vsel %vm260, %v932, 0
    %v950 = vsel %vm273, %v799, 0
    %952 = vmatprep.subr.bf16.mxu0 0
    %953 = vmatpush1.bf16.msra.mxu0 %v950
    %954 = vmatprep.subr.bf16.mxu0 0
    %955 = vmatpush1.bf16.msra.mxu0 0
    %956 = vmatprep.subr.bf16.mxu0 0
    %957 = vmatpush1.bf16.msra.mxu0 0
    %958 = vmatprep.subr.bf16.mxu0 0
    %959 = vmatpush1.bf16.msra.mxu0 0
    %960 = vmatprep.subr.bf16.mxu0 0
    %961 = vmatpush1.bf16.msra.mxu0 0
    %962 = vmatprep.subr.bf16.mxu0 0
    %963 = vmatpush1.bf16.msra.mxu0 0
    %964 = vmatprep.subr.bf16.mxu0 0
    %965 = vmatpush1.bf16.msra.mxu0 0
    %966 = vmatprep.subr.bf16.mxu0 0
    %967 = vmatpush1.bf16.msra.mxu0 0
    %968 = vmatprep.subr.bf16.mxu0 0
    %969 = vmatpush1.bf16.msra.mxu0 0
    %970 = vmatprep.subr.bf16.mxu0 0
    %971 = vmatpush1.bf16.msra.mxu0 0
    %972 = vmatprep.subr.bf16.mxu0 0
    %973 = vmatpush1.bf16.msra.mxu0 0
    %974 = vmatprep.subr.bf16.mxu0 0
    %975 = vmatpush1.bf16.msra.mxu0 0
    %976 = vmatprep.subr.bf16.mxu0 0
    %977 = vmatpush1.bf16.msra.mxu0 0
    %978 = vmatprep.subr.bf16.mxu0 0
    %979 = vmatpush1.bf16.msra.mxu0 0
    %980 = vmatprep.subr.bf16.mxu0 0
    %981 = vmatpush1.bf16.msra.mxu0 0
    %982 = vmatprep.subr.bf16.mxu0 0
    %983 = vmatpush1.bf16.msra.mxu0 0
    %984 = vmatprep.mubr.bf16.mxu0 0
    %985 = vmatmul.mubr.bf16.gmra.mrb[0].mxu0 %v938
    %v986 = vpop.f32.mrb[0].mxu0
    %v987 = vadd.f32 %v936, %v986
    %v988 = vpop.f32.mrb[0].mxu0
    %v989 = vpop.f32.mrb[0].mxu0
    %v990 = vadd.f32 %v936, %v989
    %v991 = vpop.f32.mrb[0].mxu0
    %992 = vmatprep.mubr.bf16.mxu0 0
    %993 = vmatmul.mubr.bf16.gmra.mrb[0].mxu0 %v941
    %v994 = vpop.f32.mrb[0].mxu0
    %v995 = vadd.f32 %v936, %v994
    %v996 = vpop.f32.mrb[0].mxu0
    %v997 = vpop.f32.mrb[0].mxu0
    %v998 = vadd.f32 %v936, %v997
    %v999 = vpop.f32.mrb[0].mxu0
    %1000 = vmatprep.mubr.bf16.mxu0 0
    %1001 = vmatmul.mubr.bf16.gmra.mrb[0].mxu0 %v944
    %v1002 = vpop.f32.mrb[0].mxu0
    %v1003 = vadd.f32 %v936, %v1002
    %v1004 = vpop.f32.mrb[0].mxu0
    %v1005 = vpop.f32.mrb[0].mxu0
    %v1006 = vadd.f32 %v936, %v1005
    %v1007 = vpop.f32.mrb[0].mxu0
    %1008 = vmatprep.mubr.bf16.mxu0 0
    %1009 = vmatmul.mubr.bf16.gmra.mrb[0].mxu0 %v947
    %v1010 = vpop.f32.mrb[0].mxu0
    %v1011 = vadd.f32 %v936, %v1010
    %v1012 = vpop.f32.mrb[0].mxu0
    %v1013 = vpop.f32.mrb[0].mxu0
    %v1014 = vadd.f32 %v936, %v1013
    %v1015 = vpop.f32.mrb[0].mxu0
    %1016 = vdwg.mxu0
    %v1017 = vmul.f32 %v987, 0.5
    %v1018 = vmul.f32 %v990, 0.5
    %v1019 = vmul.f32 %v995, 0.5
    %v1020 = vmul.f32 %v998, 0.5
    %v1021 = vmul.f32 %v1003, 0.5
    %v1022 = vmul.f32 %v1006, 0.5
    %v1023 = vmul.f32 %v1011, 0.5
    %v1024 = vmul.f32 %v1014, 0.5
    %v1025 = vmul.f32 %v987, 0.044715
    %v1026 = vmul.f32 %v990, 0.044715
    %v1027 = vmul.f32 %v995, 0.044715
    %v1028 = vmul.f32 %v998, 0.044715
    %v1029 = vmul.f32 %v1003, 0.044715
    %v1030 = vmul.f32 %v1006, 0.044715
    %v1031 = vmul.f32 %v1011, 0.044715
    %v1032 = vmul.f32 %v1014, 0.044715
    %v1033 = vmul.f32 %v1025, %v987
    %v1034 = vmul.f32 %v1026, %v990
    %v1035 = vmul.f32 %v1027, %v995
    %v1036 = vmul.f32 %v1028, %v998
    %v1037 = vmul.f32 %v1029, %v1003
    %v1038 = vmul.f32 %v1030, %v1006
    %v1039 = vmul.f32 %v1031, %v1011
    %v1040 = vmul.f32 %v1032, %v1014
    %v1041 = vmul.f32 %v1033, %v987
    %v1042 = vmul.f32 %v1034, %v990
    %v1043 = vmul.f32 %v1035, %v995
    %v1044 = vmul.f32 %v1036, %v998
    %v1045 = vmul.f32 %v1037, %v1003
    %v1046 = vmul.f32 %v1038, %v1006
    %v1047 = vmul.f32 %v1039, %v1011
    %v1048 = vmul.f32 %v1040, %v1014
    %v1049 = vadd.f32 %v987, %v1041
    %v1050 = vadd.f32 %v990, %v1042
    %v1051 = vadd.f32 %v995, %v1043
    %v1052 = vadd.f32 %v998, %v1044
    %v1053 = vadd.f32 %v1003, %v1045
    %v1054 = vadd.f32 %v1006, %v1046
    %v1055 = vadd.f32 %v1011, %v1047
    %v1056 = vadd.f32 %v1014, %v1048
    %v1057 = vmul.f32 %v1049, 0.7978846
    %v1058 = vmul.f32 %v1050, 0.7978846
    %v1059 = vmul.f32 %v1051, 0.7978846
    %v1060 = vmul.f32 %v1052, 0.7978846
    %v1061 = vmul.f32 %v1053, 0.7978846
    %v1062 = vmul.f32 %v1054, 0.7978846
    %v1063 = vmul.f32 %v1055, 0.7978846
    %v1064 = vmul.f32 %v1056, 0.7978846
    %v1065 = vtanh.pop %v1057
    %v1066 = vtanh.pop %v1058
    %v1067 = vtanh.pop %v1059
    %v1068 = vtanh.pop %v1060
    %v1069 = vtanh.pop %v1061
    %v1070 = vtanh.pop %v1062
    %v1071 = vtanh.pop %v1063
    %v1072 = vtanh.pop %v1064
    %v1073 = vadd.f32 %v1065, 1.0
    %v1074 = vadd.f32 %v1066, 1.0
    %v1075 = vadd.f32 %v1067, 1.0
    %v1076 = vadd.f32 %v1068, 1.0
    %v1077 = vadd.f32 %v1069, 1.0
    %v1078 = vadd.f32 %v1070, 1.0
    %v1079 = vadd.f32 %v1071, 1.0
    %v1080 = vadd.f32 %v1072, 1.0
    %v1081 = vmul.f32 %v1017, %v1073
    %v1082 = vmul.f32 %v1018, %v1074
    %v1083 = vmul.f32 %v1019, %v1075
    %v1084 = vmul.f32 %v1020, %v1076
    %v1085 = vmul.f32 %v1021, %v1077
    %v1086 = vmul.f32 %v1022, %v1078
    %v1087 = vmul.f32 %v1023, %v1079
    %v1088 = vmul.f32 %v1024, %v1080
    %v1089 = vpack.c.bf16 %v1082, %v1081
    %v1090 = vpack.c.bf16 %v1084, %v1083
    %v1091 = vpack.c.bf16 %v1086, %v1085
    %v1092 = vpack.c.bf16 %v1088, %v1087
    %v1093 = vlaneseq
    %v1094 = vshrl.u32 %v1093, 7
    %v1095 = vsub.s32 1, %v1094
    %v1096 = vrot.slane %v795, %v1095
    %v1101 = vunpack.c.l.b16 %v801
    %v1102 = vunpack.c.l.b16 %v802
    %v1103 = vunpack.c.l.b16 %v803
    %v1104 = vunpack.c.l.b16 %v804
    %v1105 = vpack.c.b16 %v1102, %v1101
    %v1106 = vpack.c.b16 %v1104, %v1103
    %v1110 = vsel %vm76, %v1089, 0
    %v1113 = vsel %vm76, %v1090, 0
    %v1116 = vsel %vm76, %v1091, 0
    %v1119 = vsel %vm76, %v1092, 0
    %1121 = vmatprep.subr.bf16.mxu0 0
    %1122 = vmatpush1.bf16.msra.mxu0 %v1105
    %1123 = vmatprep.subr.bf16.mxu0 0
    %1124 = vmatpush1.bf16.msra.mxu0 %v1106
    %1125 = vmatprep.subr.bf16.mxu0 0
    %1126 = vmatpush1.bf16.msra.mxu0 0
    %1127 = vmatprep.subr.bf16.mxu0 0
    %1128 = vmatpush1.bf16.msra.mxu0 0
    %1129 = vmatprep.subr.bf16.mxu0 0
    %1130 = vmatpush1.bf16.msra.mxu0 0
    %1131 = vmatprep.subr.bf16.mxu0 0
    %1132 = vmatpush1.bf16.msra.mxu0 0
    %1133 = vmatprep.subr.bf16.mxu0 0
    %1134 = vmatpush1.bf16.msra.mxu0 0
    %1135 = vmatprep.subr.bf16.mxu0 0
    %1136 = vmatpush1.bf16.msra.mxu0 0
    %1137 = vmatprep.subr.bf16.mxu0 0
    %1138 = vmatpush1.bf16.msra.mxu0 0
    %1139 = vmatprep.subr.bf16.mxu0 0
    %1140 = vmatpush1.bf16.msra.mxu0 0
    %1141 = vmatprep.subr.bf16.mxu0 0
    %1142 = vmatpush1.bf16.msra.mxu0 0
    %1143 = vmatprep.subr.bf16.mxu0 0
    %1144 = vmatpush1.bf16.msra.mxu0 0
    %1145 = vmatprep.subr.bf16.mxu0 0
    %1146 = vmatpush1.bf16.msra.mxu0 0
    %1147 = vmatprep.subr.bf16.mxu0 0
    %1148 = vmatpush1.bf16.msra.mxu0 0
    %1149 = vmatprep.subr.bf16.mxu0 0
    %1150 = vmatpush1.bf16.msra.mxu0 0
    %1151 = vmatprep.subr.bf16.mxu0 0
    %1152 = vmatpush1.bf16.msra.mxu0 0
    %1153 = vmatprep.mubr.bf16.mxu0 0
    %1154 = vmatmul.mubr.bf16.gmra.mrb[0].mxu0 %v1110
    %v1155 = vpop.f32.mrb[0].mxu0
    %v1156 = vadd.f32 %v1096, %v1155
    %v1157 = vpop.f32.mrb[0].mxu0
    %v1158 = vpop.f32.mrb[0].mxu0
    %v1159 = vadd.f32 %v1096, %v1158
    %v1160 = vpop.f32.mrb[0].mxu0
    %1161 = vmatprep.mubr.bf16.mxu0 0
    %1162 = vmatmul.mubr.bf16.gmra.mrb[0].mxu0 %v1113
    %v1163 = vpop.f32.mrb[0].mxu0
    %v1164 = vadd.f32 %v1096, %v1163
    %v1165 = vpop.f32.mrb[0].mxu0
    %v1166 = vpop.f32.mrb[0].mxu0
    %v1167 = vadd.f32 %v1096, %v1166
    %v1168 = vpop.f32.mrb[0].mxu0
    %1169 = vmatprep.mubr.bf16.mxu0 0
    %1170 = vmatmul.mubr.bf16.gmra.mrb[0].mxu0 %v1116
    %v1171 = vpop.f32.mrb[0].mxu0
    %v1172 = vadd.f32 %v1096, %v1171
    %v1173 = vpop.f32.mrb[0].mxu0
    %v1174 = vpop.f32.mrb[0].mxu0
    %v1175 = vadd.f32 %v1096, %v1174
    %v1176 = vpop.f32.mrb[0].mxu0
    %1177 = vmatprep.mubr.bf16.mxu0 0
    %1178 = vmatmul.mubr.bf16.gmra.mrb[0].mxu0 %v1119
    %v1179 = vpop.f32.mrb[0].mxu0
    %v1180 = vadd.f32 %v1096, %v1179
    %v1181 = vpop.f32.mrb[0].mxu0
    %v1182 = vpop.f32.mrb[0].mxu0
    %v1183 = vadd.f32 %v1096, %v1182
    %v1184 = vpop.f32.mrb[0].mxu0
    %1185 = vdwg.mxu0
    %1186 = vxpose.xlu0.b32.start [1/16] %v1156, 128
    %1187 = vxpose.xlu0.b32.cont [2/16] %v1159, 128
    %1188 = vxpose.xlu0.b32.cont [3/16] %v1164, 128
    %1189 = vxpose.xlu0.b32.cont [4/16] %v1167, 128
    %1190 = vxpose.xlu0.b32.cont [5/16] 0.0, 128
    %1191 = vxpose.xlu0.b32.cont [6/16] 0.0, 128
    %1192 = vxpose.xlu0.b32.cont [7/16] 0.0, 128
    %1193 = vxpose.xlu0.b32.cont [8/16] 0.0, 128
    %1194 = vxpose.xlu0.b32.cont [9/16] 0.0, 128
    %1195 = vxpose.xlu0.b32.cont [10/16] 0.0, 128
    %1196 = vxpose.xlu0.b32.cont [11/16] 0.0, 128
    %1197 = vxpose.xlu0.b32.cont [12/16] 0.0, 128
    %1198 = vxpose.xlu0.b32.cont [13/16] 0.0, 128
    %1199 = vxpose.xlu0.b32.cont [14/16] 0.0, 128
    %1200 = vxpose.xlu0.b32.cont [15/16] 0.0, 128
    %1201 = vxpose.xlu0.b32.end [16/16] 0.0, 128
    %v1202 = vpop.trf.xlu0
    %v1203 = vpop.trf.xlu0
    %v1204 = vpop.trf.xlu0
    %v1205 = vpop.trf.xlu0
    %v1206 = vpop.trf.xlu0
    %v1207 = vpop.trf.xlu0
    %v1208 = vpop.trf.xlu0
    %v1209 = vpop.trf.xlu0
    %v1210 = vpop.trf.xlu0
    %v1211 = vpop.trf.xlu0
    %v1212 = vpop.trf.xlu0
    %v1213 = vpop.trf.xlu0
    %v1214 = vpop.trf.xlu0
    %v1215 = vpop.trf.xlu0
    %v1216 = vpop.trf.xlu0
    %v1217 = vpop.trf.xlu0
    %1218 = vxpose.xlu0.b32.start [1/16] %v1172, 128
    %1219 = vxpose.xlu0.b32.cont [2/16] %v1175, 128
    %1220 = vxpose.xlu0.b32.cont [3/16] %v1180, 128
    %1221 = vxpose.xlu0.b32.cont [4/16] %v1183, 128
    %1222 = vxpose.xlu0.b32.cont [5/16] 0.0, 128
    %1223 = vxpose.xlu0.b32.cont [6/16] 0.0, 128
    %1224 = vxpose.xlu0.b32.cont [7/16] 0.0, 128
    %1225 = vxpose.xlu0.b32.cont [8/16] 0.0, 128
    %1226 = vxpose.xlu0.b32.cont [9/16] 0.0, 128
    %1227 = vxpose.xlu0.b32.cont [10/16] 0.0, 128
    %1228 = vxpose.xlu0.b32.cont [11/16] 0.0, 128
    %1229 = vxpose.xlu0.b32.cont [12/16] 0.0, 128
    %1230 = vxpose.xlu0.b32.cont [13/16] 0.0, 128
    %1231 = vxpose.xlu0.b32.cont [14/16] 0.0, 128
    %1232 = vxpose.xlu0.b32.cont [15/16] 0.0, 128
    %1233 = vxpose.xlu0.b32.end [16/16] 0.0, 128
    %v1234 = vpop.trf.xlu0
    %v1235 = vpop.trf.xlu0
    %v1236 = vpop.trf.xlu0
    %v1237 = vpop.trf.xlu0
    %v1238 = vpop.trf.xlu0
    %v1239 = vpop.trf.xlu0
    %v1240 = vpop.trf.xlu0
    %v1241 = vpop.trf.xlu0
    %v1242 = vpop.trf.xlu0
    %v1243 = vpop.trf.xlu0
    %v1244 = vpop.trf.xlu0
    %v1245 = vpop.trf.xlu0
    %v1246 = vpop.trf.xlu0
    %v1247 = vpop.trf.xlu0
    %v1248 = vpop.trf.xlu0
    %v1249 = vpop.trf.xlu0
    %v1250 = vadd.f32 %v790, %v1202
    %v1251 = vadd.f32 %v791, %v1234
    %v1252 = vsel %vm76, %v1250, 0.0
    %1253 = vadd.xlane.f32.xlu0 %v1252
    %v1254 = vpop.xlane.xlu0 %1253
    %v1255 = vsel %vm76, %v1251, 0.0
    %1256 = vadd.xlane.f32.xlu0 %v1255
    %v1257 = vpop.xlane.xlu0 %1256
    %v1258 = vmul.f32 %v1254, %v155
    %v1259 = vmul.f32 %v1257, %v155
    %v1260 = vsub.f32 %v1250, %v1258
    %v1261 = vsub.f32 %v1251, %v1259
    %v1262 = vmul.f32 %v1260, %v1260
    %v1263 = vmul.f32 %v1261, %v1261
    %v1264 = vsel %vm76, %v1262, 0.0
    %1265 = vadd.xlane.f32.xlu0 %v1264
    %v1266 = vpop.xlane.xlu0 %1265
    %v1267 = vsel %vm76, %v1263, 0.0
    %1268 = vadd.xlane.f32.xlu0 %v1267
    %v1269 = vpop.xlane.xlu0 %1268
    %v1270 = vmul.f32 %v1266, %v155
    %v1271 = vmul.f32 %v1269, %v155
    %v1272 = vadd.f32 %v1270, 1e-05
    %v1273 = vadd.f32 %v1271, 1e-05
    %v1274 = vrsqrt.pop %v1272
    %v1275 = vrsqrt.pop %v1273
    %v1276 = vmul.f32 %v1260, %v1274
    %v1277 = vmul.f32 %v1261, %v1275
    %v1278 = vlaneseq
    %v1279 = vshrl.u32 %v1278, 7
    %v1280 = vsub.s32 2, %v1279
    %v1281 = vrot.slane %v793, %v1280
    %v1282 = vmul.f32 %v1276, %v1281
    %v1283 = vmul.f32 %v1277, %v1281
    %v1284 = vlaneseq
    %v1285 = vshrl.u32 %v1284, 7
    %v1286 = vsub.s32 3, %v1285
    %v1287 = vrot.slane %v793, %v1286
    %v1288 = vadd.f32 %v1282, %v1287
    %v1289 = vadd.f32 %v1283, %v1287
    %v1290 = vpack.c.bf16 %v1289, %v1288
    %v1292 = vlaneseq
    %v1293 = vshrl.u32 %v1292, 7
    %v1294 = vsub.s32 0, %v1293
    %v1295 = vrot.slane %v797, %v1294
    %v1301 = vunpack.c.l.b16 %v806
    %v1302 = vunpack.c.l.b16 %v807
    %v1303 = vunpack.c.l.b16 %v808
    %v1304 = vunpack.c.l.b16 %v809
    %v1305 = vpack.c.b16 %v1302, %v1301
    %v1306 = vpack.c.b16 %v1304, %v1303
    %v1310 = vsel %vm76, %v1290, 0
    %1312 = vmatprep.subr.bf16.mxu0 0
    %1313 = vmatpush1.bf16.msra.mxu0 %v1305
    %1314 = vmatprep.subr.bf16.mxu0 0
    %1315 = vmatpush1.bf16.msra.mxu0 %v1306
    %1316 = vmatprep.subr.bf16.mxu0 0
    %1317 = vmatpush1.bf16.msra.mxu0 0
    %1318 = vmatprep.subr.bf16.mxu0 0
    %1319 = vmatpush1.bf16.msra.mxu0 0
    %1320 = vmatprep.subr.bf16.mxu0 0
    %1321 = vmatpush1.bf16.msra.mxu0 0
    %1322 = vmatprep.subr.bf16.mxu0 0
    %1323 = vmatpush1.bf16.msra.mxu0 0
    %1324 = vmatprep.subr.bf16.mxu0 0
    %1325 = vmatpush1.bf16.msra.mxu0 0
    %1326 = vmatprep.subr.bf16.mxu0 0
    %1327 = vmatpush1.bf16.msra.mxu0 0
    %1328 = vmatprep.subr.bf16.mxu0 0
    %1329 = vmatpush1.bf16.msra.mxu0 0
    %1330 = vmatprep.subr.bf16.mxu0 0
    %1331 = vmatpush1.bf16.msra.mxu0 0
    %1332 = vmatprep.subr.bf16.mxu0 0
    %1333 = vmatpush1.bf16.msra.mxu0 0
    %1334 = vmatprep.subr.bf16.mxu0 0
    %1335 = vmatpush1.bf16.msra.mxu0 0
    %1336 = vmatprep.subr.bf16.mxu0 0
    %1337 = vmatpush1.bf16.msra.mxu0 0
    %1338 = vmatprep.subr.bf16.mxu0 0
    %1339 = vmatpush1.bf16.msra.mxu0 0
    %1340 = vmatprep.subr.bf16.mxu0 0
    %1341 = vmatpush1.bf16.msra.mxu0 0
    %1342 = vmatprep.subr.bf16.mxu0 0
    %1343 = vmatpush1.bf16.msra.mxu0 0
    %1344 = vmatprep.mubr.bf16.mxu0 0
    %1345 = vmatmul.mubr.bf16.gmra.mrb[0].mxu0 %v1310
    %v1346 = vpop.f32.mrb[0].mxu0
    %v1347 = vadd.f32 %v1295, %v1346
    %v1348 = vpop.f32.mrb[0].mxu0
    %v1349 = vpop.f32.mrb[0].mxu0
    %v1350 = vadd.f32 %v1295, %v1349
    %v1351 = vpop.f32.mrb[0].mxu0
    %1352 = vdwg.mxu0
    %v1353 = vmul.f32 %v1347, 0.5
    %v1354 = vmul.f32 %v1350, 0.5
    %v1355 = vmul.f32 %v1347, 0.044715
    %v1356 = vmul.f32 %v1350, 0.044715
    %v1357 = vmul.f32 %v1355, %v1347
    %v1358 = vmul.f32 %v1356, %v1350
    %v1359 = vmul.f32 %v1357, %v1347
    %v1360 = vmul.f32 %v1358, %v1350
    %v1361 = vadd.f32 %v1347, %v1359
    %v1362 = vadd.f32 %v1350, %v1360
    %v1363 = vmul.f32 %v1361, 0.7978846
    %v1364 = vmul.f32 %v1362, 0.7978846
    %v1365 = vtanh.pop %v1363
    %v1366 = vtanh.pop %v1364
    %v1367 = vadd.f32 %v1365, 1.0
    %v1368 = vadd.f32 %v1366, 1.0
    %v1369 = vmul.f32 %v1353, %v1367
    %v1370 = vmul.f32 %v1354, %v1368
    %v1371 = vpack.c.bf16 %v1370, %v1369
    %v1372 = vlaneseq
    %v1373 = vshrl.u32 %v1372, 7
    %v1374 = vsub.s32 4, %v1373
    %v1375 = vrot.slane %v793, %v1374
    %v1392 = vunpack.c.l.b16 %v811
    %v1393 = vunpack.c.l.b16 %v812
    %v1394 = vunpack.c.l.b16 %v813
    %v1395 = vunpack.c.l.b16 %v814
    %v1396 = vunpack.c.l.b16 %v815
    %v1397 = vunpack.c.l.b16 %v816
    %v1398 = vunpack.c.l.b16 %v817
    %v1399 = vunpack.c.l.b16 %v818
    %v1400 = vunpack.c.l.b16 %v819
    %v1401 = vunpack.c.l.b16 %v820
    %v1402 = vunpack.c.l.b16 %v821
    %v1403 = vunpack.c.l.b16 %v822
    %v1404 = vunpack.c.l.b16 %v823
    %v1405 = vunpack.c.l.b16 %v824
    %v1406 = vunpack.c.l.b16 %v825
    %v1407 = vunpack.c.l.b16 %v826
    %v1408 = vpack.c.b16 %v1393, %v1392
    %v1409 = vpack.c.b16 %v1395, %v1394
    %v1410 = vpack.c.b16 %v1397, %v1396
    %v1411 = vpack.c.b16 %v1399, %v1398
    %v1412 = vpack.c.b16 %v1401, %v1400
    %v1413 = vpack.c.b16 %v1403, %v1402
    %v1414 = vpack.c.b16 %v1405, %v1404
    %v1415 = vpack.c.b16 %v1407, %v1406
    %1424 = vmatprep.subr.bf16.mxu0 0
    %1425 = vmatpush1.bf16.msra.mxu0 %v1408
    %1426 = vmatprep.subr.bf16.mxu0 0
    %1427 = vmatpush1.bf16.msra.mxu0 %v1409
    %1428 = vmatprep.subr.bf16.mxu0 0
    %1429 = vmatpush1.bf16.msra.mxu0 %v1410
    %1430 = vmatprep.subr.bf16.mxu0 0
    %1431 = vmatpush1.bf16.msra.mxu0 %v1411
    %1432 = vmatprep.subr.bf16.mxu0 0
    %1433 = vmatpush1.bf16.msra.mxu0 %v1412
    %1434 = vmatprep.subr.bf16.mxu0 0
    %1435 = vmatpush1.bf16.msra.mxu0 %v1413
    %1436 = vmatprep.subr.bf16.mxu0 0
    %1437 = vmatpush1.bf16.msra.mxu0 %v1414
    %1438 = vmatprep.subr.bf16.mxu0 0
    %1439 = vmatpush1.bf16.msra.mxu0 %v1415
    %1440 = vmatprep.subr.bf16.mxu0 0
    %1441 = vmatpush1.bf16.msra.mxu0 0
    %1442 = vmatprep.subr.bf16.mxu0 0
    %1443 = vmatpush1.bf16.msra.mxu0 0
    %1444 = vmatprep.subr.bf16.mxu0 0
    %1445 = vmatpush1.bf16.msra.mxu0 0
    %1446 = vmatprep.subr.bf16.mxu0 0
    %1447 = vmatpush1.bf16.msra.mxu0 0
    %1448 = vmatprep.subr.bf16.mxu0 0
    %1449 = vmatpush1.bf16.msra.mxu0 0
    %1450 = vmatprep.subr.bf16.mxu0 0
    %1451 = vmatpush1.bf16.msra.mxu0 0
    %1452 = vmatprep.subr.bf16.mxu0 0
    %1453 = vmatpush1.bf16.msra.mxu0 0
    %1454 = vmatprep.subr.bf16.mxu0 0
    %1455 = vmatpush1.bf16.msra.mxu0 0
    %1456 = vmatprep.mubr.bf16.mxu0 0
    %1457 = vmatmul.mubr.bf16.gmra.mrb[0].mxu0 %v1371
    %v1458 = vpop.f32.mrb[0].mxu0
    %v1459 = vadd.f32 %v1375, %v1458
    %v1460 = vpop.f32.mrb[0].mxu0
    %v1461 = vpop.f32.mrb[0].mxu0
    %v1462 = vadd.f32 %v1375, %v1461
    %v1463 = vpop.f32.mrb[0].mxu0
    %1464 = vdwg.mxu0
    %v1465 = vadd.f32 %v1250, %v1459
    %v1466 = vadd.f32 %v1251, %v1462
    %v1467 = vld [vmem:[%s3] sm:$0x3]
    %v1468 = vld [vmem:[%s4] sm:$0xf]
    %v1469 = vld [vmem:[%s4 + $0x4] sm:$0xf]
    %v1470 = vld [vmem:[%s4 + $0x8] sm:$0xf]
    %v1471 = vld [vmem:[%s4 + $0xc] sm:$0xf]
    %v1472 = vld [vmem:[%s5] sm:$0x1]
    %v1473 = vsel %vm76, %v1465, 0.0
    %1474 = vadd.xlane.f32.xlu0 %v1473
    %v1475 = vpop.xlane.xlu0 %1474
    %v1476 = vsel %vm76, %v1466, 0.0
    %1477 = vadd.xlane.f32.xlu0 %v1476
    %v1478 = vpop.xlane.xlu0 %1477
    %v1479 = vmul.f32 %v1475, %v155
    %v1480 = vmul.f32 %v1478, %v155
    %v1481 = vsub.f32 %v1465, %v1479
    %v1482 = vsub.f32 %v1466, %v1480
    %v1483 = vmul.f32 %v1481, %v1481
    %v1484 = vmul.f32 %v1482, %v1482
    %v1485 = vsel %vm76, %v1483, 0.0
    %1486 = vadd.xlane.f32.xlu0 %v1485
    %v1487 = vpop.xlane.xlu0 %1486
    %v1488 = vsel %vm76, %v1484, 0.0
    %1489 = vadd.xlane.f32.xlu0 %v1488
    %v1490 = vpop.xlane.xlu0 %1489
    %v1491 = vmul.f32 %v1487, %v155
    %v1492 = vmul.f32 %v1490, %v155
    %v1493 = vadd.f32 %v1491, 1e-05
    %v1494 = vadd.f32 %v1492, 1e-05
    %v1495 = vrsqrt.pop %v1493
    %v1496 = vrsqrt.pop %v1494
    %v1497 = vmul.f32 %v1481, %v1495
    %v1498 = vmul.f32 %v1482, %v1496
    %v1499 = vlaneseq
    %v1500 = vshrl.u32 %v1499, 7
    %v1501 = vsub.s32 0, %v1500
    %v1502 = vrot.slane %v1467, %v1501
    %v1503 = vmul.f32 %v1497, %v1502
    %v1504 = vmul.f32 %v1498, %v1502
    %v1505 = vlaneseq
    %v1506 = vshrl.u32 %v1505, 7
    %v1507 = vsub.s32 1, %v1506
    %v1508 = vrot.slane %v1467, %v1507
    %v1509 = vadd.f32 %v1503, %v1508
    %v1510 = vadd.f32 %v1504, %v1508
    %v1511 = vsel %vm76, %v1509, 0.0
    %v1512 = vrot.slane %v1511, 4
    %v1513 = vadd.f32 %v1511, %v1512
    %v1514 = vrot.slane %v1513, 2
    %v1515 = vadd.f32 %v1513, %v1514
    %v1516 = vrot.slane %v1515, 1
    %v1517 = vadd.f32 %v1515, %v1516
    %v1518 = vsel %vm76, %v1510, 0.0
    %v1519 = vrot.slane %v1518, 4
    %v1520 = vadd.f32 %v1518, %v1519
    %v1521 = vrot.slane %v1520, 2
    %v1522 = vadd.f32 %v1520, %v1521
    %v1523 = vrot.slane %v1522, 1
    %v1524 = vadd.f32 %v1522, %v1523
    %v1525 = vrcp.pop 8.0
    %v1526 = vmul.f32 %v1517, %v1525
    %v1527 = vmul.f32 %v1524, %v1525
    %v1528 = vpack.c.bf16 %v1526, %v1526
    %v1529 = vpack.c.bf16 %v1527, %v1527
    %v1531 = vlaneseq
    %v1532 = vshrl.u32 %v1531, 7
    %v1533 = vsub.s32 0, %v1532
    %v1534 = vrot.slane %v1472, %v1533
    %v1538 = vunpack.c.l.b16 %v1528
    %v1539 = vunpack.c.l.b16 %v1529
    %vm1540 = vcmask 1041409
    %v1541 = vsel %vm1540, %v1539, %v1538
    %v1542 = vpack.c.b16 %v1541, %v1541
    %v1547 = vunpack.c.l.b16 %v1468
    %v1548 = vunpack.c.l.b16 %v1469
    %v1549 = vunpack.c.l.b16 %v1470
    %v1550 = vunpack.c.l.b16 %v1471
    %v1551 = vpack.c.b16 %v1548, %v1547
    %v1552 = vpack.c.b16 %v1550, %v1549
    %v1556 = vsel %vm76, %v1542, 0
    %1558 = vmatprep.subr.bf16.mxu0 0
    %1559 = vmatpush1.bf16.msra.mxu0 %v1551
    %1560 = vmatprep.subr.bf16.mxu0 0
    %1561 = vmatpush1.bf16.msra.mxu0 %v1552
    %1562 = vmatprep.subr.bf16.mxu0 0
    %1563 = vmatpush1.bf16.msra.mxu0 0
    %1564 = vmatprep.subr.bf16.mxu0 0
    %1565 = vmatpush1.bf16.msra.mxu0 0
    %1566 = vmatprep.subr.bf16.mxu0 0
    %1567 = vmatpush1.bf16.msra.mxu0 0
    %1568 = vmatprep.subr.bf16.mxu0 0
    %1569 = vmatpush1.bf16.msra.mxu0 0
    %1570 = vmatprep.subr.bf16.mxu0 0
    %1571 = vmatpush1.bf16.msra.mxu0 0
    %1572 = vmatprep.subr.bf16.mxu0 0
    %1573 = vmatpush1.bf16.msra.mxu0 0
    %1574 = vmatprep.subr.bf16.mxu0 0
    %1575 = vmatpush1.bf16.msra.mxu0 0
    %1576 = vmatprep.subr.bf16.mxu0 0
    %1577 = vmatpush1.bf16.msra.mxu0 0
    %1578 = vmatprep.subr.bf16.mxu0 0
    %1579 = vmatpush1.bf16.msra.mxu0 0
    %1580 = vmatprep.subr.bf16.mxu0 0
    %1581 = vmatpush1.bf16.msra.mxu0 0
    %1582 = vmatprep.subr.bf16.mxu0 0
    %1583 = vmatpush1.bf16.msra.mxu0 0
    %1584 = vmatprep.subr.bf16.mxu0 0
    %1585 = vmatpush1.bf16.msra.mxu0 0
    %1586 = vmatprep.subr.bf16.mxu0 0
    %1587 = vmatpush1.bf16.msra.mxu0 0
    %1588 = vmatprep.subr.bf16.mxu0 0
    %1589 = vmatpush1.bf16.msra.mxu0 0
    %1590 = vmatprep.mubr.bf16.mxu0 0
    %1591 = vmatmul.mubr.bf16.gmra.mrb[0].mxu0 %v1556
    %v1592 = vpop.f32.mrb[0].mxu0
    %v1593 = vadd.f32 %v1534, %v1592
    %v1594 = vpop.f32.mrb[0].mxu0
    %v1595 = vpop.f32.mrb[0].mxu0
    %v1596 = vpop.f32.mrb[0].mxu0
    %1597 = vdwg.mxu0
    %v1598 = vxor.u32 %v1593, 2147483648
    %v1599 = vmul.f32 %v1598, 1.442695
    %v1600 = vpow.pop %v1599
    %v1601 = vadd.f32 %v1600, 1.0
    %v1602 = vrcp.pop %v1601
    %v1603 = vmul.f32 1.0, %v1602
    %vm1604 = vcmask 17408
    %1605 = vst.msk [vmem:[#allocation2] sm:$0x3] %vm1604, %v1603
    // Predicated region
    $region54: #{tpu_custom_call.1} parent=1 // pred_check
      _
    $region55: #{tpu_custom_call.1} parent=1 // pred_check_branch
      %1607 = sbr.rel (0) target = $region57
    $region56: #{tpu_custom_call.1} parent=1 // pred_region
      %s1609 = ssub.s32 32, 32
      %1610 = vsyncadd [#allocation3], %s1609
      %s1612 = sshll.u32 [#allocation2], 4
      %s1613 = int_to_ptr.vmem [resolvable:$true] %s1612
      %1615 = dma.vmem_to_hbm [thread:$0]  %s1613, 32, %s13, [#allocation3]
    $region57: #{tpu_custom_call.1} parent=1 // pred_fallthru
      _
    // Predicated region
    $region58: #{tpu_custom_call.1} parent=1 // pred_check
      _
    $region59: #{tpu_custom_call.1} parent=1 // pred_check_branch
      %1617 = sbr.rel (0) target = $region61
    $region60: #{tpu_custom_call.1} parent=1 // pred_region
      %1618 = dma.done [#allocation3], 32
    $region61: #{tpu_custom_call.1} parent=1 // pred_fallthru
      _
    %1619 = vsyncpa [#allocation3], 1

</llo_original>
